<compile_context>
chip_gen: v7x
topology: tpu7x:2x2x1
jax: 0.10.0
libtpu: 0.0.40
codegen_flags: <defaults>
</compile_context>

<pallas_src>
import random
import functools

import jax
import jax.numpy as jnp
from jax.experimental import pallas as pl
from jax.experimental.pallas import tpu as pltpu


def _round_up(x, m):
    return ((x + m - 1) // m) * m


def _sample_bucket_indices(Lk, bucket_size, seed):
    """One random index per bucket (host RNG), sorted — matches the module."""
    rng = random.Random(seed)
    groups = [list(range(i, min(i + bucket_size, Lk)))
              for i in range(0, Lk, bucket_size)]
    return sorted(rng.choice(g) for g in groups)


# ---------------------------------------------------------------------------
# Pallas kernel: full MHA for one batch element per grid step.
# ---------------------------------------------------------------------------
def _mha_kernel(kv_len_ref,                          # scalar prefetch (SMEM), (B,) i32
                q_ref, k_ref, v_ref,                 # (1,Lq,E), (1,Ls,E), (1,Ls,E) bf16
                wqT_ref, wkT_ref, wvT_ref, woT_ref,  # (E,E) bf16, pre-transposed
                bq_ref, bk_ref, bv_ref, bo_ref,      # (1,E) f32
                out_ref, attw_ref,                   # (1,Lq,E) f32, (1,Lq,Ls) f32
                ctx_ref,                             # VMEM scratch (Lq,E) f32
                *, num_heads):
    b = pl.program_id(0)
    kv_len = kv_len_ref[b]

    q = q_ref[0]                 # (Lq, E)  bf16
    k = k_ref[0]                 # (Ls, E)  bf16
    v = v_ref[0]                 # (Ls, E)  bf16

    Lq, E = q.shape
    Ls = k.shape[0]
    Dh = E // num_heads
    cdt = q.dtype                # MXU input dtype (bf16)

    # in_proj: x @ W^T + b.  Weights are already transposed (and the 1/sqrt(Dh)
    # Q-scale folded into wqT / bq) on the host -> plain MXU matmuls here.
    qp = (jnp.dot(q, wqT_ref[...], preferred_element_type=jnp.float32)
          + bq_ref[...]).astype(cdt)
    kp = (jnp.dot(k, wkT_ref[...], preferred_element_type=jnp.float32)
          + bk_ref[...]).astype(cdt)
    vp = (jnp.dot(v, wvT_ref[...], preferred_element_type=jnp.float32)
          + bv_ref[...]).astype(cdt)

    # key padding mask as a single additive f32 bias, hoisted out of the head
    # loop (one vadd per head instead of a select).  Finite value -> no NaN on
    # fully-masked rows; exp underflows to exactly 0 for masked columns.
    col = jax.lax.broadcasted_iota(jnp.int32, (Lq, Ls), 1)
    mask_bias = jnp.where(col >= kv_len, jnp.float32(-1e30), jnp.float32(0.0))
    inv_h = jnp.float32(1.0 / num_heads)

    w_acc = jnp.zeros((Lq, Ls), jnp.float32)
    # TODO(synk): with Dh < 256 the per-head K=Dh contraction underfills the
    # MXU; that is inherent to MHA (batching heads does not change it).  The
    # static loop is fully unrolled at trace time (num_heads is a Python int).
    for h in range(num_heads):
        lo = h * Dh
        qh = qp[:, lo:lo + Dh]
        kh = kp[:, lo:lo + Dh]
        vh = vp[:, lo:lo + Dh]

        # q @ k^T without materialising a transpose (NT dot_general).
        s = jax.lax.dot_general(qh, kh, (((1,), (1,)), ((), ())),
                                preferred_element_type=jnp.float32)   # (Lq, Ls)
        s = s + mask_bias
        m = jnp.max(s, axis=-1, keepdims=True)
        e = jnp.exp(s - m)                                            # EUP
        l = jnp.sum(e, axis=-1, keepdims=True)                        # XLU
        p = e * pl.reciprocal(l, approx=True)                         # softmax

        # write this head's context straight into the f32 scratch slab
        # (no concat, no per-head bf16 cast).
        ctx_ref[:, lo:lo + Dh] = jnp.dot(
            p.astype(cdt), vh, preferred_element_type=jnp.float32)
        w_acc = w_acc + p

    # single K=E out-projection matmul over the concatenated head contexts.
    out = (jnp.dot(ctx_ref[...].astype(cdt), woT_ref[...],
                   preferred_element_type=jnp.float32) + bo_ref[...])
    out_ref[0] = out.astype(out_ref.dtype)
    attw_ref[0] = (w_acc * inv_h).astype(attw_ref.dtype)


def _mha_pallas(q_b, k_b, v_b, kv_len, kparams, num_heads):
    """q_b: (B, Lq, E), k_b/v_b: (B, Ls, E) bf16; kv_len: (B,) int32."""
    B, Lq, E = q_b.shape
    Ls = k_b.shape[1]
    wqT, wkT, wvT, woT, bq, bk, bv, bo = kparams

    grid_spec = pltpu.PrefetchScalarGridSpec(
        num_scalar_prefetch=1,
        grid=(B,),
        in_specs=[
            pl.BlockSpec((1, Lq, E), lambda b, *_: (b, 0, 0)),
            pl.BlockSpec((1, Ls, E), lambda b, *_: (b, 0, 0)),
            pl.BlockSpec((1, Ls, E), lambda b, *_: (b, 0, 0)),
            # grid-invariant weight / bias blocks (constant index_map -> the
            # pipeline keeps them resident in VMEM across grid steps).
            pl.BlockSpec((E, E), lambda b, *_: (0, 0)),
            pl.BlockSpec((E, E), lambda b, *_: (0, 0)),
            pl.BlockSpec((E, E), lambda b, *_: (0, 0)),
            pl.BlockSpec((E, E), lambda b, *_: (0, 0)),
            pl.BlockSpec((1, E), lambda b, *_: (0, 0)),
            pl.BlockSpec((1, E), lambda b, *_: (0, 0)),
            pl.BlockSpec((1, E), lambda b, *_: (0, 0)),
            pl.BlockSpec((1, E), lambda b, *_: (0, 0)),
        ],
        out_specs=[
            pl.BlockSpec((1, Lq, E), lambda b, *_: (b, 0, 0)),
            pl.BlockSpec((1, Lq, Ls), lambda b, *_: (b, 0, 0)),
        ],
        scratch_shapes=[pltpu.VMEM((Lq, E), jnp.float32)],
    )

    flops = 2 * B * (2 * Lq * E * E + 2 * Ls * E * E + 2 * Lq * Ls * E)
    transcendentals = B * num_heads * Lq * Ls
    bytes_accessed = int(
        sum(int(a.size) * a.dtype.itemsize
            for a in (q_b, k_b, v_b, wqT, wkT, wvT, woT, bq, bk, bv, bo))
        + B * Lq * E * 4 + B * Lq * Ls * 4)

    out, attw = pl.pallas_call(
        functools.partial(_mha_kernel, num_heads=num_heads),
        grid_spec=grid_spec,
        out_shape=(
            jax.ShapeDtypeStruct((B, Lq, E), jnp.float32),
            jax.ShapeDtypeStruct((B, Lq, Ls), jnp.float32),
        ),
        compiler_params=pltpu.CompilerParams(
            dimension_semantics=("parallel",),    # B independent -> v7x 2x TC
            vmem_limit_bytes=32 * 1024 * 1024),
        cost_estimate=pl.CostEstimate(
            flops=flops, transcendentals=transcendentals,
            bytes_accessed=bytes_accessed),
    )(kv_len, q_b, k_b, v_b, wqT, wkT, wvT, woT, bq, bk, bv, bo)
    return out, attw


def prepare_mha_params(raw_params, num_heads, compute_dtype=jnp.bfloat16):
    """Pre-transpose weights, fold the 1/sqrt(Dh) Q-scale, cast for the kernel."""
    wq, wk, wv, wo, bq, bk, bv, bo = raw_params
    E = wq.shape[0]
    scale = (E // num_heads) ** -0.5
    wqT = (wq * scale).T.astype(compute_dtype)
    wkT = wk.T.astype(compute_dtype)
    wvT = wv.T.astype(compute_dtype)
    woT = wo.T.astype(compute_dtype)
    bq_s = (bq * scale).reshape(1, E).astype(jnp.float32)
    bk2 = bk.reshape(1, E).astype(jnp.float32)
    bv2 = bv.reshape(1, E).astype(jnp.float32)
    bo2 = bo.reshape(1, E).astype(jnp.float32)
    # NOTE: a fused single in-proj would only be valid for k is v
    # (self-attention); this module's signature allows distinct k / v tensors.
    return (wqT, wkT, wvT, woT, bq_s, bk2, bv2, bo2)


def bucket_random_attention(q, k, v, key_length, kparams, *, num_heads,
                            bucket_size, seed=0, compute_dtype=jnp.bfloat16):
    """q: (Lq, B, E), k/v: (Lk, B, E), key_length: (B,) int32 or None.

    Returns (attn_output (Lq, B, E), attn_weights (B, Lq, Ls)) — same tuple as
    `self.attn(q, k, v, key_padding_mask=mask)` in the PyTorch module.
    """
    Lq, B, E = q.shape
    Lk = k.shape[0]

    # --- sampling glue (random.choice per bucket, then sorted) ---
    sampled = _sample_bucket_indices(Lk, bucket_size, seed)
    Ls = len(sampled)
    sampled_index = jnp.asarray(sampled, dtype=jnp.int32)            # (Ls,)

    if key_length is None:
        modified_key_length = jnp.full((B,), Ls, dtype=jnp.int32)
    else:
        modified_key_length = jnp.sum(
            (sampled_index[None, :] < key_length[:, None]).astype(jnp.int32),
            axis=1).astype(jnp.int32)                                # (B,)

    k_s = k[sampled_index, :, :]                                     # (Ls, B, E)
    v_s = v[sampled_index, :, :]

    # (L, B, E) -> (B, L, E) + cast to bf16 in one fused XLA pass.
    q_b = jnp.transpose(q, (1, 0, 2)).astype(compute_dtype)
    k_b = jnp.transpose(k_s, (1, 0, 2)).astype(compute_dtype)
    v_b = jnp.transpose(v_s, (1, 0, 2)).astype(compute_dtype)

    # Pad the sampled-key axis to a lane-dense multiple of 128 so the
    # attention-weight output store is an unmasked full-lane vst.  Padded keys
    # are masked inside the kernel (col >= kv_len) and sliced off below.
    Ls_pad = _round_up(Ls, 128)
    if Ls_pad != Ls:
        pad = Ls_pad - Ls
        k_b = jnp.pad(k_b, ((0, 0), (0, pad), (0, 0)))
        v_b = jnp.pad(v_b, ((0, 0), (0, pad), (0, 0)))

    out_b, attw = _mha_pallas(q_b, k_b, v_b, modified_key_length, kparams,
                              num_heads)

    attn_output = jnp.transpose(out_b, (1, 0, 2))                    # (Lq, B, E)
    attn_weights = attw[:, :, :Ls]
    return attn_output, attn_weights


def init_mha_params(key, d_model):
    """Deterministic synthetic nn.MultiheadAttention parameters (torch layout)."""
    k1, k2, k3 = jax.random.split(key, 3)
    in_proj_weight = 0.1 * jax.random.normal(k1, (3 * d_model, d_model),
                                             dtype=jnp.float32)
    in_proj_bias = 0.1 * jax.random.normal(k2, (3 * d_model,),
                                           dtype=jnp.float32)
    out_proj_weight = 0.1 * jax.random.normal(k3, (d_model, d_model),
                                              dtype=jnp.float32)
    out_proj_bias = jnp.zeros((d_model,), dtype=jnp.float32)

    wq = in_proj_weight[0 * d_model:1 * d_model]
    wk = in_proj_weight[1 * d_model:2 * d_model]
    wv = in_proj_weight[2 * d_model:3 * d_model]
    bq = in_proj_bias[0 * d_model:1 * d_model]
    bk = in_proj_bias[1 * d_model:2 * d_model]
    bv = in_proj_bias[2 * d_model:3 * d_model]
    return (wq, wk, wv, out_proj_weight, bq, bk, bv, out_proj_bias)


if __name__ == "__main__":
    d_model = 32
    num_heads = 4
    bucket_size = 2
    Lq, Lk, B = 8, 16, 2
    seed = 0

    key = jax.random.PRNGKey(0)
    kq, kk, kv_, kp = jax.random.split(key, 4)

    q = jax.random.normal(kq, (Lq, B, d_model), dtype=jnp.float32)
    k = jax.random.normal(kk, (Lk, B, d_model), dtype=jnp.float32)
    v = jax.random.normal(kv_, (Lk, B, d_model), dtype=jnp.float32)
    key_length = jnp.array([12, 16], dtype=jnp.int32)

    kparams = prepare_mha_params(init_mha_params(kp, d_model), num_heads)

    attn_out, attn_w = bucket_random_attention(
        q, k, v, key_length, kparams,
        num_heads=num_heads, bucket_size=bucket_size, seed=seed)
    jax.block_until_ready((attn_out, attn_w))

    Ls = (Lk + bucket_size - 1) // bucket_size
    assert attn_out.shape == (Lq, B, d_model)
    assert attn_w.shape == (B, Lq, Ls)
    assert bool(jnp.all(jnp.isfinite(attn_out)))
    assert bool(jnp.all(jnp.isfinite(attn_w)))

    # softmax rows sum to ~1 (bf16 matmuls + approx reciprocal tolerance)
    assert bool(jnp.all(jnp.abs(jnp.sum(attn_w, axis=-1) - 1.0) < 1e-2))

    # sampled keys outside each sequence's key_length must get ~0 avg weight
    sampled = _sample_bucket_indices(Lk, bucket_size, seed)
    for bi in range(B):
        mkl = sum(1 for s in sampled if s < int(key_length[bi]))
        if mkl < Ls:
            assert bool(jnp.max(jnp.abs(attn_w[bi, :, mkl:])) < 1e-6)

    print("KERNEL_OK")
</pallas_src>

<mosaic_0001>
module attributes {stable_mosaic.version = 11 : i64} {
  func.func @_mha_kernel(%arg0: i32, %arg1: memref<2xi32, #tpu.memory_space<smem>>, %arg2: memref<1x8x32xbf16, #tpu.memory_space<vmem>>, %arg3: memref<1x128x32xbf16, #tpu.memory_space<vmem>>, %arg4: memref<1x128x32xbf16, #tpu.memory_space<vmem>>, %arg5: memref<32x32xbf16, #tpu.memory_space<vmem>>, %arg6: memref<32x32xbf16, #tpu.memory_space<vmem>>, %arg7: memref<32x32xbf16, #tpu.memory_space<vmem>>, %arg8: memref<32x32xbf16, #tpu.memory_space<vmem>>, %arg9: memref<1x32xf32, #tpu.memory_space<vmem>>, %arg10: memref<1x32xf32, #tpu.memory_space<vmem>>, %arg11: memref<1x32xf32, #tpu.memory_space<vmem>>, %arg12: memref<1x32xf32, #tpu.memory_space<vmem>>, %arg13: memref<1x8x32xf32, #tpu.memory_space<vmem>>, %arg14: memref<1x8x128xf32, #tpu.memory_space<vmem>>, %arg15: memref<8x32xf32, #tpu.memory_space<vmem>>) attributes {dimension_semantics = [#tpu.dimension_semantics<parallel>], iteration_bounds = array<i64: 2>, scalar_prefetch = 1 : i64, scratch_operands = 1 : i64, tpu.core_type = #tpu.core_type<tc>, window_params = [{transform_indices = @transform_0, window_bounds = array<i64: 1, 8, 32>}, {transform_indices = @transform_1, window_bounds = array<i64: 1, 128, 32>}, {transform_indices = @transform_2, window_bounds = array<i64: 1, 128, 32>}, {pipeline_mode = #tpu.pipeline_mode<synchronous>, transform_indices = @transform_3, window_bounds = array<i64: 32, 32>}, {pipeline_mode = #tpu.pipeline_mode<synchronous>, transform_indices = @transform_4, window_bounds = array<i64: 32, 32>}, {pipeline_mode = #tpu.pipeline_mode<synchronous>, transform_indices = @transform_5, window_bounds = array<i64: 32, 32>}, {pipeline_mode = #tpu.pipeline_mode<synchronous>, transform_indices = @transform_6, window_bounds = array<i64: 32, 32>}, {pipeline_mode = #tpu.pipeline_mode<synchronous>, transform_indices = @transform_7, window_bounds = array<i64: 1, 32>}, {pipeline_mode = #tpu.pipeline_mode<synchronous>, transform_indices = @transform_8, window_bounds = array<i64: 1, 32>}, {pipeline_mode = #tpu.pipeline_mode<synchronous>, transform_indices = @transform_9, window_bounds = array<i64: 1, 32>}, {pipeline_mode = #tpu.pipeline_mode<synchronous>, transform_indices = @transform_10, window_bounds = array<i64: 1, 32>}, {transform_indices = @transform_11, window_bounds = array<i64: 1, 8, 32>}, {transform_indices = @transform_12, window_bounds = array<i64: 1, 8, 128>}]} {
    %0 = arith.index_cast %arg0 : i32 to index
    %1 = memref.load %arg1[%0] : memref<2xi32, #tpu.memory_space<smem>>
    %c0 = arith.constant 0 : index
    %c0_0 = arith.constant 0 : index
    %c0_1 = arith.constant 0 : index
    %2 = vector.load %arg2[%c0, %c0_0, %c0_1] : memref<1x8x32xbf16, #tpu.memory_space<vmem>>, vector<1x8x32xbf16>
    %3 = vector.shape_cast %2 : vector<1x8x32xbf16> to vector<8x32xbf16>
    %c0_2 = arith.constant 0 : index
    %c0_3 = arith.constant 0 : index
    %c0_4 = arith.constant 0 : index
    %4 = vector.load %arg3[%c0_2, %c0_3, %c0_4] : memref<1x128x32xbf16, #tpu.memory_space<vmem>>, vector<1x128x32xbf16>
    %5 = vector.shape_cast %4 : vector<1x128x32xbf16> to vector<128x32xbf16>
    %c0_5 = arith.constant 0 : index
    %c0_6 = arith.constant 0 : index
    %c0_7 = arith.constant 0 : index
    %6 = vector.load %arg4[%c0_5, %c0_6, %c0_7] : memref<1x128x32xbf16, #tpu.memory_space<vmem>>, vector<1x128x32xbf16>
    %7 = vector.shape_cast %6 : vector<1x128x32xbf16> to vector<128x32xbf16>
    %c0_8 = arith.constant 0 : index
    %c0_9 = arith.constant 0 : index
    %8 = vector.load %arg5[%c0_8, %c0_9] : memref<32x32xbf16, #tpu.memory_space<vmem>>, vector<32x32xbf16>
    %cst = arith.constant dense<0.000000e+00> : vector<8x32xf32>
    %9 = tpu.matmul %3, %8, %cst {dimension_numbers = #tpu.dot_dimension_numbers<[1], [0], [0], [1], [0, 0, 1, 1], [], []>} : vector<8x32xbf16>, vector<32x32xbf16>, vector<8x32xf32> -> vector<8x32xf32>
    %c0_10 = arith.constant 0 : index
    %c0_11 = arith.constant 0 : index
    %10 = vector.load %arg9[%c0_10, %c0_11] : memref<1x32xf32, #tpu.memory_space<vmem>>, vector<1x32xf32>
    %11 = vector.broadcast %10 : vector<1x32xf32> to vector<8x32xf32>
    %12 = arith.addf %9, %11 : vector<8x32xf32>
    %13 = arith.truncf %12 : vector<8x32xf32> to vector<8x32xbf16>
    %c0_12 = arith.constant 0 : index
    %c0_13 = arith.constant 0 : index
    %14 = vector.load %arg6[%c0_12, %c0_13] : memref<32x32xbf16, #tpu.memory_space<vmem>>, vector<32x32xbf16>
    %cst_14 = arith.constant dense<0.000000e+00> : vector<128x32xf32>
    %15 = tpu.matmul %5, %14, %cst_14 {dimension_numbers = #tpu.dot_dimension_numbers<[1], [0], [0], [1], [0, 0, 1, 1], [], []>} : vector<128x32xbf16>, vector<32x32xbf16>, vector<128x32xf32> -> vector<128x32xf32>
    %c0_15 = arith.constant 0 : index
    %c0_16 = arith.constant 0 : index
    %16 = vector.load %arg10[%c0_15, %c0_16] : memref<1x32xf32, #tpu.memory_space<vmem>>, vector<1x32xf32>
    %17 = vector.broadcast %16 : vector<1x32xf32> to vector<128x32xf32>
    %18 = arith.addf %15, %17 : vector<128x32xf32>
    %19 = arith.truncf %18 : vector<128x32xf32> to vector<128x32xbf16>
    %c0_17 = arith.constant 0 : index
    %c0_18 = arith.constant 0 : index
    %20 = vector.load %arg7[%c0_17, %c0_18] : memref<32x32xbf16, #tpu.memory_space<vmem>>, vector<32x32xbf16>
    %cst_19 = arith.constant dense<0.000000e+00> : vector<128x32xf32>
    %21 = tpu.matmul %7, %20, %cst_19 {dimension_numbers = #tpu.dot_dimension_numbers<[1], [0], [0], [1], [0, 0, 1, 1], [], []>} : vector<128x32xbf16>, vector<32x32xbf16>, vector<128x32xf32> -> vector<128x32xf32>
    %c0_20 = arith.constant 0 : index
    %c0_21 = arith.constant 0 : index
    %22 = vector.load %arg11[%c0_20, %c0_21] : memref<1x32xf32, #tpu.memory_space<vmem>>, vector<1x32xf32>
    %23 = vector.broadcast %22 : vector<1x32xf32> to vector<128x32xf32>
    %24 = arith.addf %21, %23 : vector<128x32xf32>
    %25 = arith.truncf %24 : vector<128x32xf32> to vector<128x32xbf16>
    %26 = tpu.iota {dimensions = array<i32: 1>} : vector<8x128xi32>
    %27 = vector.broadcast %1 : i32 to vector<8x128xi32>
    %28 = arith.cmpi sge, %26, %27 : vector<8x128xi32>
    %cst_22 = arith.constant -1.000000e+30 : f32
    %cst_23 = arith.constant 0.000000e+00 : f32
    %29 = vector.broadcast %cst_22 : f32 to vector<8x128xf32>
    %30 = vector.broadcast %cst_23 : f32 to vector<8x128xf32>
    %31 = arith.select %28, %29, %30 : vector<8x128xi1>, vector<8x128xf32>
    %cst_24 = arith.constant 0.000000e+00 : f32
    %32 = vector.broadcast %cst_24 : f32 to vector<8x128xf32>
    %33 = vector.extract_strided_slice %13 {offsets = [0, 0], sizes = [8, 8], strides = [1, 1]} : vector<8x32xbf16> to vector<8x8xbf16>
    %34 = vector.extract_strided_slice %19 {offsets = [0, 0], sizes = [128, 8], strides = [1, 1]} : vector<128x32xbf16> to vector<128x8xbf16>
    %35 = vector.extract_strided_slice %25 {offsets = [0, 0], sizes = [128, 8], strides = [1, 1]} : vector<128x32xbf16> to vector<128x8xbf16>
    %cst_25 = arith.constant dense<0.000000e+00> : vector<8x128xf32>
    %36 = tpu.matmul %33, %34, %cst_25 {dimension_numbers = #tpu.dot_dimension_numbers<[1], [1], [0], [0], [0, 0, 1, 0], [], []>} : vector<8x8xbf16>, vector<128x8xbf16>, vector<8x128xf32> -> vector<8x128xf32>
    %37 = arith.addf %36, %31 : vector<8x128xf32>
    %cst_26 = arith.constant dense<0xFF800000> : vector<8xf32>
    %38 = vector.multi_reduction <maximumf>, %37, %cst_26 [1] : vector<8x128xf32> to vector<8xf32>
    %39 = vector.shape_cast %38 : vector<8xf32> to vector<8x1xf32>
    %40 = vector.broadcast %39 : vector<8x1xf32> to vector<8x128xf32>
    %41 = arith.subf %37, %40 : vector<8x128xf32>
    %42 = math.exp %41 : vector<8x128xf32>
    %cst_27 = arith.constant dense<0.000000e+00> : vector<8xf32>
    %43 = vector.multi_reduction <add>, %42, %cst_27 [1] : vector<8x128xf32> to vector<8xf32>
    %44 = vector.shape_cast %43 : vector<8xf32> to vector<8x1xf32>
    %45 = tpu.reciprocal %44 {approx = true} : vector<8x1xf32> -> vector<8x1xf32>
    %46 = vector.broadcast %45 : vector<8x1xf32> to vector<8x128xf32>
    %47 = arith.mulf %42, %46 : vector<8x128xf32>
    %48 = arith.truncf %47 : vector<8x128xf32> to vector<8x128xbf16>
    %cst_28 = arith.constant dense<0.000000e+00> : vector<8x8xf32>
    %49 = tpu.matmul %48, %35, %cst_28 {dimension_numbers = #tpu.dot_dimension_numbers<[1], [0], [0], [1], [0, 0, 1, 1], [], []>} : vector<8x128xbf16>, vector<128x8xbf16>, vector<8x8xf32> -> vector<8x8xf32>
    %c0_29 = arith.constant 0 : index
    %c0_30 = arith.constant 0 : index
    %50 = vector.load %arg15[%c0_29, %c0_30] : memref<8x32xf32, #tpu.memory_space<vmem>>, vector<8x8xf32>
    tpu.vector_store %arg15[%c0_29, %c0_30], %49 {strides = array<i32>} : memref<8x32xf32, #tpu.memory_space<vmem>>, vector<8x8xf32>,
    %51 = arith.addf %32, %47 : vector<8x128xf32>
    %52 = vector.extract_strided_slice %13 {offsets = [0, 8], sizes = [8, 8], strides = [1, 1]} : vector<8x32xbf16> to vector<8x8xbf16>
    %53 = vector.extract_strided_slice %19 {offsets = [0, 8], sizes = [128, 8], strides = [1, 1]} : vector<128x32xbf16> to vector<128x8xbf16>
    %54 = vector.extract_strided_slice %25 {offsets = [0, 8], sizes = [128, 8], strides = [1, 1]} : vector<128x32xbf16> to vector<128x8xbf16>
    %cst_31 = arith.constant dense<0.000000e+00> : vector<8x128xf32>
    %55 = tpu.matmul %52, %53, %cst_31 {dimension_numbers = #tpu.dot_dimension_numbers<[1], [1], [0], [0], [0, 0, 1, 0], [], []>} : vector<8x8xbf16>, vector<128x8xbf16>, vector<8x128xf32> -> vector<8x128xf32>
    %56 = arith.addf %55, %31 : vector<8x128xf32>
    %cst_32 = arith.constant dense<0xFF800000> : vector<8xf32>
    %57 = vector.multi_reduction <maximumf>, %56, %cst_32 [1] : vector<8x128xf32> to vector<8xf32>
    %58 = vector.shape_cast %57 : vector<8xf32> to vector<8x1xf32>
    %59 = vector.broadcast %58 : vector<8x1xf32> to vector<8x128xf32>
    %60 = arith.subf %56, %59 : vector<8x128xf32>
    %61 = math.exp %60 : vector<8x128xf32>
    %cst_33 = arith.constant dense<0.000000e+00> : vector<8xf32>
    %62 = vector.multi_reduction <add>, %61, %cst_33 [1] : vector<8x128xf32> to vector<8xf32>
    %63 = vector.shape_cast %62 : vector<8xf32> to vector<8x1xf32>
    %64 = tpu.reciprocal %63 {approx = true} : vector<8x1xf32> -> vector<8x1xf32>
    %65 = vector.broadcast %64 : vector<8x1xf32> to vector<8x128xf32>
    %66 = arith.mulf %61, %65 : vector<8x128xf32>
    %67 = arith.truncf %66 : vector<8x128xf32> to vector<8x128xbf16>
    %cst_34 = arith.constant dense<0.000000e+00> : vector<8x8xf32>
    %68 = tpu.matmul %67, %54, %cst_34 {dimension_numbers = #tpu.dot_dimension_numbers<[1], [0], [0], [1], [0, 0, 1, 1], [], []>} : vector<8x128xbf16>, vector<128x8xbf16>, vector<8x8xf32> -> vector<8x8xf32>
    %c0_35 = arith.constant 0 : index
    %c8 = arith.constant 8 : index
    %69 = vector.load %arg15[%c0_35, %c8] : memref<8x32xf32, #tpu.memory_space<vmem>>, vector<8x8xf32>
    tpu.vector_store %arg15[%c0_35, %c8], %68 {strides = array<i32>} : memref<8x32xf32, #tpu.memory_space<vmem>>, vector<8x8xf32>,
    %70 = arith.addf %51, %66 : vector<8x128xf32>
    %71 = vector.extract_strided_slice %13 {offsets = [0, 16], sizes = [8, 8], strides = [1, 1]} : vector<8x32xbf16> to vector<8x8xbf16>
    %72 = vector.extract_strided_slice %19 {offsets = [0, 16], sizes = [128, 8], strides = [1, 1]} : vector<128x32xbf16> to vector<128x8xbf16>
    %73 = vector.extract_strided_slice %25 {offsets = [0, 16], sizes = [128, 8], strides = [1, 1]} : vector<128x32xbf16> to vector<128x8xbf16>
    %cst_36 = arith.constant dense<0.000000e+00> : vector<8x128xf32>
    %74 = tpu.matmul %71, %72, %cst_36 {dimension_numbers = #tpu.dot_dimension_numbers<[1], [1], [0], [0], [0, 0, 1, 0], [], []>} : vector<8x8xbf16>, vector<128x8xbf16>, vector<8x128xf32> -> vector<8x128xf32>
    %75 = arith.addf %74, %31 : vector<8x128xf32>
    %cst_37 = arith.constant dense<0xFF800000> : vector<8xf32>
    %76 = vector.multi_reduction <maximumf>, %75, %cst_37 [1] : vector<8x128xf32> to vector<8xf32>
    %77 = vector.shape_cast %76 : vector<8xf32> to vector<8x1xf32>
    %78 = vector.broadcast %77 : vector<8x1xf32> to vector<8x128xf32>
    %79 = arith.subf %75, %78 : vector<8x128xf32>
    %80 = math.exp %79 : vector<8x128xf32>
    %cst_38 = arith.constant dense<0.000000e+00> : vector<8xf32>
    %81 = vector.multi_reduction <add>, %80, %cst_38 [1] : vector<8x128xf32> to vector<8xf32>
    %82 = vector.shape_cast %81 : vector<8xf32> to vector<8x1xf32>
    %83 = tpu.reciprocal %82 {approx = true} : vector<8x1xf32> -> vector<8x1xf32>
    %84 = vector.broadcast %83 : vector<8x1xf32> to vector<8x128xf32>
    %85 = arith.mulf %80, %84 : vector<8x128xf32>
    %86 = arith.truncf %85 : vector<8x128xf32> to vector<8x128xbf16>
    %cst_39 = arith.constant dense<0.000000e+00> : vector<8x8xf32>
    %87 = tpu.matmul %86, %73, %cst_39 {dimension_numbers = #tpu.dot_dimension_numbers<[1], [0], [0], [1], [0, 0, 1, 1], [], []>} : vector<8x128xbf16>, vector<128x8xbf16>, vector<8x8xf32> -> vector<8x8xf32>
    %c0_40 = arith.constant 0 : index
    %c16 = arith.constant 16 : index
    %88 = vector.load %arg15[%c0_40, %c16] : memref<8x32xf32, #tpu.memory_space<vmem>>, vector<8x8xf32>
    tpu.vector_store %arg15[%c0_40, %c16], %87 {strides = array<i32>} : memref<8x32xf32, #tpu.memory_space<vmem>>, vector<8x8xf32>,
    %89 = arith.addf %70, %85 : vector<8x128xf32>
    %90 = vector.extract_strided_slice %13 {offsets = [0, 24], sizes = [8, 8], strides = [1, 1]} : vector<8x32xbf16> to vector<8x8xbf16>
    %91 = vector.extract_strided_slice %19 {offsets = [0, 24], sizes = [128, 8], strides = [1, 1]} : vector<128x32xbf16> to vector<128x8xbf16>
    %92 = vector.extract_strided_slice %25 {offsets = [0, 24], sizes = [128, 8], strides = [1, 1]} : vector<128x32xbf16> to vector<128x8xbf16>
    %cst_41 = arith.constant dense<0.000000e+00> : vector<8x128xf32>
    %93 = tpu.matmul %90, %91, %cst_41 {dimension_numbers = #tpu.dot_dimension_numbers<[1], [1], [0], [0], [0, 0, 1, 0], [], []>} : vector<8x8xbf16>, vector<128x8xbf16>, vector<8x128xf32> -> vector<8x128xf32>
    %94 = arith.addf %93, %31 : vector<8x128xf32>
    %cst_42 = arith.constant dense<0xFF800000> : vector<8xf32>
    %95 = vector.multi_reduction <maximumf>, %94, %cst_42 [1] : vector<8x128xf32> to vector<8xf32>
    %96 = vector.shape_cast %95 : vector<8xf32> to vector<8x1xf32>
    %97 = vector.broadcast %96 : vector<8x1xf32> to vector<8x128xf32>
    %98 = arith.subf %94, %97 : vector<8x128xf32>
    %99 = math.exp %98 : vector<8x128xf32>
    %cst_43 = arith.constant dense<0.000000e+00> : vector<8xf32>
    %100 = vector.multi_reduction <add>, %99, %cst_43 [1] : vector<8x128xf32> to vector<8xf32>
    %101 = vector.shape_cast %100 : vector<8xf32> to vector<8x1xf32>
    %102 = tpu.reciprocal %101 {approx = true} : vector<8x1xf32> -> vector<8x1xf32>
    %103 = vector.broadcast %102 : vector<8x1xf32> to vector<8x128xf32>
    %104 = arith.mulf %99, %103 : vector<8x128xf32>
    %105 = arith.truncf %104 : vector<8x128xf32> to vector<8x128xbf16>
    %cst_44 = arith.constant dense<0.000000e+00> : vector<8x8xf32>
    %106 = tpu.matmul %105, %92, %cst_44 {dimension_numbers = #tpu.dot_dimension_numbers<[1], [0], [0], [1], [0, 0, 1, 1], [], []>} : vector<8x128xbf16>, vector<128x8xbf16>, vector<8x8xf32> -> vector<8x8xf32>
    %c0_45 = arith.constant 0 : index
    %c24 = arith.constant 24 : index
    %107 = vector.load %arg15[%c0_45, %c24] : memref<8x32xf32, #tpu.memory_space<vmem>>, vector<8x8xf32>
    tpu.vector_store %arg15[%c0_45, %c24], %106 {strides = array<i32>} : memref<8x32xf32, #tpu.memory_space<vmem>>, vector<8x8xf32>,
    %108 = arith.addf %89, %104 : vector<8x128xf32>
    %c0_46 = arith.constant 0 : index
    %c0_47 = arith.constant 0 : index
    %109 = vector.load %arg15[%c0_46, %c0_47] : memref<8x32xf32, #tpu.memory_space<vmem>>, vector<8x32xf32>
    %110 = arith.truncf %109 : vector<8x32xf32> to vector<8x32xbf16>
    %c0_48 = arith.constant 0 : index
    %c0_49 = arith.constant 0 : index
    %111 = vector.load %arg8[%c0_48, %c0_49] : memref<32x32xbf16, #tpu.memory_space<vmem>>, vector<32x32xbf16>
    %cst_50 = arith.constant dense<0.000000e+00> : vector<8x32xf32>
    %112 = tpu.matmul %110, %111, %cst_50 {dimension_numbers = #tpu.dot_dimension_numbers<[1], [0], [0], [1], [0, 0, 1, 1], [], []>} : vector<8x32xbf16>, vector<32x32xbf16>, vector<8x32xf32> -> vector<8x32xf32>
    %c0_51 = arith.constant 0 : index
    %c0_52 = arith.constant 0 : index
    %113 = vector.load %arg12[%c0_51, %c0_52] : memref<1x32xf32, #tpu.memory_space<vmem>>, vector<1x32xf32>
    %114 = vector.broadcast %113 : vector<1x32xf32> to vector<8x32xf32>
    %115 = arith.addf %112, %114 : vector<8x32xf32>
    %c0_53 = arith.constant 0 : index
    %c0_54 = arith.constant 0 : index
    %c0_55 = arith.constant 0 : index
    %116 = vector.load %arg13[%c0_53, %c0_54, %c0_55] : memref<1x8x32xf32, #tpu.memory_space<vmem>>, vector<1x8x32xf32>
    %117 = vector.shape_cast %116 : vector<1x8x32xf32> to vector<8x32xf32>
    %118 = vector.shape_cast %115 : vector<8x32xf32> to vector<1x8x32xf32>
    tpu.vector_store %arg13[%c0_53, %c0_54, %c0_55], %118 {strides = array<i32>} : memref<1x8x32xf32, #tpu.memory_space<vmem>>, vector<1x8x32xf32>,
    %cst_56 = arith.constant 2.500000e-01 : f32
    %119 = vector.broadcast %cst_56 : f32 to vector<8x128xf32>
    %120 = arith.mulf %108, %119 : vector<8x128xf32>
    %c0_57 = arith.constant 0 : index
    %c0_58 = arith.constant 0 : index
    %c0_59 = arith.constant 0 : index
    %121 = vector.load %arg14[%c0_57, %c0_58, %c0_59] : memref<1x8x128xf32, #tpu.memory_space<vmem>>, vector<1x8x128xf32>
    %122 = vector.shape_cast %121 : vector<1x8x128xf32> to vector<8x128xf32>
    %123 = vector.shape_cast %120 : vector<8x128xf32> to vector<1x8x128xf32>
    tpu.vector_store %arg14[%c0_57, %c0_58, %c0_59], %123 {strides = array<i32>} : memref<1x8x128xf32, #tpu.memory_space<vmem>>, vector<1x8x128xf32>,
    return
  }
  func.func @transform_0(%arg0: i32, %arg1: memref<2xi32, #tpu.memory_space<smem>>) -> (i32, i32, i32) {
    %c0_i32 = arith.constant 0 : i32
    %c0_i32_0 = arith.constant 0 : i32
    %c0_i32_1 = arith.constant 0 : i32
    return %arg0, %c0_i32, %c0_i32_0 : i32, i32, i32
  }
  func.func @transform_1(%arg0: i32, %arg1: memref<2xi32, #tpu.memory_space<smem>>) -> (i32, i32, i32) {
    %c0_i32 = arith.constant 0 : i32
    %c0_i32_0 = arith.constant 0 : i32
    %c0_i32_1 = arith.constant 0 : i32
    return %arg0, %c0_i32, %c0_i32_0 : i32, i32, i32
  }
  func.func @transform_2(%arg0: i32, %arg1: memref<2xi32, #tpu.memory_space<smem>>) -> (i32, i32, i32) {
    %c0_i32 = arith.constant 0 : i32
    %c0_i32_0 = arith.constant 0 : i32
    %c0_i32_1 = arith.constant 0 : i32
    return %arg0, %c0_i32, %c0_i32_0 : i32, i32, i32
  }
  func.func @transform_3(%arg0: i32, %arg1: memref<2xi32, #tpu.memory_space<smem>>) -> (i32, i32) {
    %c0_i32 = arith.constant 0 : i32
    %c0_i32_0 = arith.constant 0 : i32
    %c0_i32_1 = arith.constant 0 : i32
    return %c0_i32, %c0_i32_0 : i32, i32
  }
  func.func @transform_4(%arg0: i32, %arg1: memref<2xi32, #tpu.memory_space<smem>>) -> (i32, i32) {
    %c0_i32 = arith.constant 0 : i32
    %c0_i32_0 = arith.constant 0 : i32
    %c0_i32_1 = arith.constant 0 : i32
    return %c0_i32, %c0_i32_0 : i32, i32
  }
  func.func @transform_5(%arg0: i32, %arg1: memref<2xi32, #tpu.memory_space<smem>>) -> (i32, i32) {
    %c0_i32 = arith.constant 0 : i32
    %c0_i32_0 = arith.constant 0 : i32
    %c0_i32_1 = arith.constant 0 : i32
    return %c0_i32, %c0_i32_0 : i32, i32
  }
  func.func @transform_6(%arg0: i32, %arg1: memref<2xi32, #tpu.memory_space<smem>>) -> (i32, i32) {
    %c0_i32 = arith.constant 0 : i32
    %c0_i32_0 = arith.constant 0 : i32
    %c0_i32_1 = arith.constant 0 : i32
    return %c0_i32, %c0_i32_0 : i32, i32
  }
  func.func @transform_7(%arg0: i32, %arg1: memref<2xi32, #tpu.memory_space<smem>>) -> (i32, i32) {
    %c0_i32 = arith.constant 0 : i32
    %c0_i32_0 = arith.constant 0 : i32
    %c0_i32_1 = arith.constant 0 : i32
    return %c0_i32, %c0_i32_0 : i32, i32
  }
  func.func @transform_8(%arg0: i32, %arg1: memref<2xi32, #tpu.memory_space<smem>>) -> (i32, i32) {
    %c0_i32 = arith.constant 0 : i32
    %c0_i32_0 = arith.constant 0 : i32
    %c0_i32_1 = arith.constant 0 : i32
    return %c0_i32, %c0_i32_0 : i32, i32
  }
  func.func @transform_9(%arg0: i32, %arg1: memref<2xi32, #tpu.memory_space<smem>>) -> (i32, i32) {
    %c0_i32 = arith.constant 0 : i32
    %c0_i32_0 = arith.constant 0 : i32
    %c0_i32_1 = arith.constant 0 : i32
    return %c0_i32, %c0_i32_0 : i32, i32
  }
  func.func @transform_10(%arg0: i32, %arg1: memref<2xi32, #tpu.memory_space<smem>>) -> (i32, i32) {
    %c0_i32 = arith.constant 0 : i32
    %c0_i32_0 = arith.constant 0 : i32
    %c0_i32_1 = arith.constant 0 : i32
    return %c0_i32, %c0_i32_0 : i32, i32
  }
  func.func @transform_11(%arg0: i32, %arg1: memref<2xi32, #tpu.memory_space<smem>>) -> (i32, i32, i32) {
    %c0_i32 = arith.constant 0 : i32
    %c0_i32_0 = arith.constant 0 : i32
    %c0_i32_1 = arith.constant 0 : i32
    return %arg0, %c0_i32, %c0_i32_0 : i32, i32, i32
  }
  func.func @transform_12(%arg0: i32, %arg1: memref<2xi32, #tpu.memory_space<smem>>) -> (i32, i32, i32) {
    %c0_i32 = arith.constant 0 : i32
    %c0_i32_0 = arith.constant 0 : i32
    %c0_i32_1 = arith.constant 0 : i32
    return %arg0, %c0_i32, %c0_i32_0 : i32, i32, i32
  }
}

</mosaic_0001>

<llo_original>
// kernel: tpu_custom_call.1
$region0: #{tpu_custom_call.1}
  #allocation0 [shape = 'u32[]', space=smem, size = 0x4, offset = 0x4, fixed_abs, tag = 'smem constant byte address 0x4 - core index']
  #allocation1 [shape = 'u32[144,128]{1,0:T(1,128)}', space=vmem, size = 0x12000, scoped, tag = 'internal scratch']
  #allocation2 [shape = 'f32[8,32]{1,0:T(8,128)}', space=vmem, size = 0x1000, scoped, tag = 'scratch operand']
  #allocation3 [shape = 's32[1]{0}', space=sflag, size = 0x4, scoped, tag = 'scoped memory for tpu_custom_call.1']
  #allocation4 [shape = 'u8[512]{0}', space=smem, size = 0x200, scoped, tag = 'prefetched SMEM operand 0']
  %s0 = inlined_call_operand.vmem [shape: s32[2], index: 0, kind: input, shape index: {}]
  %s1 = inlined_call_operand.vmem [shape: bf16[2,8,32], index: 1, kind: input, shape index: {}]
  %s2 = inlined_call_operand.vmem [shape: bf16[2,128,32], index: 2, kind: input, shape index: {}]
  %s3 = inlined_call_operand.vmem [shape: bf16[2,128,32], index: 3, kind: input, shape index: {}]
  %s4 = inlined_call_operand.vmem [shape: bf16[32,32], index: 4, kind: input, shape index: {}]
  %s5 = inlined_call_operand.vmem [shape: bf16[32,32], index: 5, kind: input, shape index: {}]
  %s6 = inlined_call_operand.vmem [shape: bf16[32,32], index: 6, kind: input, shape index: {}]
  %s7 = inlined_call_operand.vmem [shape: bf16[32,32], index: 7, kind: input, shape index: {}]
  %s8 = inlined_call_operand.vmem [shape: f32[1,32], index: 8, kind: input, shape index: {}]
  %s9 = inlined_call_operand.vmem [shape: f32[1,32], index: 9, kind: input, shape index: {}]
  %s10 = inlined_call_operand.vmem [shape: f32[1,32], index: 10, kind: input, shape index: {}]
  %s11 = inlined_call_operand.vmem [shape: f32[1,32], index: 11, kind: input, shape index: {}]
  %s12 = inlined_call_operand.hbm [shape: f32[2,8,32], index: 12, kind: output, shape index: {0}]
  %s13 = inlined_call_operand.hbm [shape: f32[2,8,128], index: 13, kind: output, shape index: {1}]
  %14 = xla_tuple %s12, %s13
  %s15 = sld [smem:[#allocation0]]
  $region85: #{tpu_custom_call.1} parent=0
    _
  %s17 = ssub.s32 1, %s15
  %s18 = scalar_select 0, %s17, %s15
  %s19 = sshll.u32 %s0, 4
  %s20 = int_to_ptr.vmem [resolvable:$true] %s19
  %22 = dma.vmem_to_smem %s20, 16, [#allocation4], [#allocation3]
  %23 = dma.done [#allocation3], 16
  %24 = sfence
  $region1: #{tpu_custom_call.1} parent=0
    #allocation5 [shape = 'u8[8192]{0}', space=vmem, size = 0x2000, scoped, tag = 'output window, operand 0']
    #allocation6 [shape = 's32[2]{0}', space=sflag, size = 0x8, scoped, tag = 'scoped memory for tpu_custom_call.1']
    #allocation7 [shape = 'u8[8192]{0}', space=vmem, size = 0x2000, scoped, tag = 'output window, operand 1']
    #allocation8 [shape = 's32[2]{0}', space=sflag, size = 0x8, scoped, tag = 'scoped memory for tpu_custom_call.1']
    %25 = vsyncpa [#allocation6], 0
    %s26 = scalar_lea.sflag [#allocation6], 1
    %27 = vsyncpa %s26, 0
    %28 = vsyncpa [#allocation8], 0
    %s29 = scalar_lea.sflag [#allocation8], 1
    %30 = vsyncpa %s29, 0
    loop: start=0, step=1, limit=4
    $region2: #{tpu_custom_call.1} parent=1 // loop_pre_header
      _
    $region3: #{tpu_custom_call.1} parent=1 // loop_header
      %s32 = sphi 0, %s36
      %p33 = scmp.ge.s32.totalorder %s32, 4
      %s42 = sphi 0, %s44
      %s45 = sphi 0, %s42
      %s46 = sphi 0, %s45
      %s62 = sphi 0, %s46
      %s68 = sphi 0, %s70
      %s71 = sphi 0, %s68
      %s72 = sphi 0, %s71
      %s88 = sphi 0, %s72
      %s94 = sphi 0, %s96
      %s97 = sphi 0, %s94
      %s98 = sphi 0, %s97
      %s114 = sphi 0, %s98
      %s118 = sphi 0, %s118
      %s120 = sphi 0, %s118
      %s121 = sphi 0, %s120
      %s135 = sphi 0, %s121
      %s139 = sphi 0, %s139
      %s141 = sphi 0, %s139
      %s142 = sphi 0, %s141
      %s156 = sphi 0, %s142
      %s160 = sphi 0, %s160
      %s162 = sphi 0, %s160
      %s163 = sphi 0, %s162
      %s177 = sphi 0, %s163
      %s181 = sphi 0, %s181
      %s183 = sphi 0, %s181
      %s184 = sphi 0, %s183
      %s198 = sphi 0, %s184
      %s202 = sphi 0, %s202
      %s204 = sphi 0, %s202
      %s205 = sphi 0, %s204
      %s219 = sphi 0, %s205
      %s223 = sphi 0, %s223
      %s225 = sphi 0, %s223
      %s226 = sphi 0, %s225
      %s240 = sphi 0, %s226
      %s244 = sphi 0, %s244
      %s246 = sphi 0, %s244
      %s247 = sphi 0, %s246
      %s261 = sphi 0, %s247
      %s265 = sphi 0, %s265
      %s267 = sphi 0, %s265
      %s268 = sphi 0, %s267
      %s282 = sphi 0, %s268
      %s288 = sphi 0, %s290
      %s291 = sphi 0, %s288
      %s292 = sphi 0, %s291
      %s308 = sphi 0, %s292
      %s314 = sphi 0, %s316
      %s317 = sphi 0, %s314
      %s318 = sphi 0, %s317
      %s334 = sphi 0, %s318
    $region4: #{tpu_custom_call.1} parent=1 // loop_header_branch
      %35 = sbr.rel (%p33) target = $region8
    $region5: #{tpu_custom_call.1} parent=1 // loop_body
      %s37 = ssub.s32 %s32, 1
      %s38 = ssub.s32 %s32, 2
      %s39 = sadd.s32 %s32, 1
      %s40 = ssub.s32 %s32, %s39
      %p41 = scmp.eq.s32.totalorder %s40, 0
      %s43 = sadd.s32 %s42, 1
      %s44 = scalar_select %p41, %s42, %s43
      %p47 = pneg %p41
      %p48 = scmp.eq.s32.totalorder %s32, 1
      %p49 = por %p47, %p48
      %p50 = scmp.ne.s32.totalorder %s42, %s45
      %p51 = scmp.eq.s32.totalorder %s32, 0
      %p52 = por %p50, %p51
      %p53 = scmp.ne.s32.totalorder %s42, %s45
      %p54 = scmp.eq.s32.totalorder %s37, 1
      %p55 = por %p53, %p54
      %p56 = scmp.ne.s32.totalorder %s45, %s46
      %p57 = scmp.eq.s32.totalorder %s37, 0
      %p58 = por %p56, %p57
      %p59 = scmp.ne.s32.totalorder %s45, %s46
      %p60 = scmp.eq.s32.totalorder %s38, 1
      %p61 = por %p59, %p60
      %p63 = scmp.ne.s32.totalorder %s46, %s62
      %p64 = scmp.eq.s32.totalorder %s38, 0
      %p65 = por %p63, %p64
      %s66 = ssub.s32 %s32, %s39
      %p67 = scmp.eq.s32.totalorder %s66, 0
      %s69 = sadd.s32 %s68, 1
      %s70 = scalar_select %p67, %s68, %s69
      %p73 = pneg %p67
      %p74 = scmp.eq.s32.totalorder %s32, 1
      %p75 = por %p73, %p74
      %p76 = scmp.ne.s32.totalorder %s68, %s71
      %p77 = scmp.eq.s32.totalorder %s32, 0
      %p78 = por %p76, %p77
      %p79 = scmp.ne.s32.totalorder %s68, %s71
      %p80 = scmp.eq.s32.totalorder %s37, 1
      %p81 = por %p79, %p80
      %p82 = scmp.ne.s32.totalorder %s71, %s72
      %p83 = scmp.eq.s32.totalorder %s37, 0
      %p84 = por %p82, %p83
      %p85 = scmp.ne.s32.totalorder %s71, %s72
      %p86 = scmp.eq.s32.totalorder %s38, 1
      %p87 = por %p85, %p86
      %p89 = scmp.ne.s32.totalorder %s72, %s88
      %p90 = scmp.eq.s32.totalorder %s38, 0
      %p91 = por %p89, %p90
      %s92 = ssub.s32 %s32, %s39
      %p93 = scmp.eq.s32.totalorder %s92, 0
      %s95 = sadd.s32 %s94, 1
      %s96 = scalar_select %p93, %s94, %s95
      %p99 = pneg %p93
      %p100 = scmp.eq.s32.totalorder %s32, 1
      %p101 = por %p99, %p100
      %p102 = scmp.ne.s32.totalorder %s94, %s97
      %p103 = scmp.eq.s32.totalorder %s32, 0
      %p104 = por %p102, %p103
      %p105 = scmp.ne.s32.totalorder %s94, %s97
      %p106 = scmp.eq.s32.totalorder %s37, 1
      %p107 = por %p105, %p106
      %p108 = scmp.ne.s32.totalorder %s97, %s98
      %p109 = scmp.eq.s32.totalorder %s37, 0
      %p110 = por %p108, %p109
      %p111 = scmp.ne.s32.totalorder %s97, %s98
      %p112 = scmp.eq.s32.totalorder %s38, 1
      %p113 = por %p111, %p112
      %p115 = scmp.ne.s32.totalorder %s98, %s114
      %p116 = scmp.eq.s32.totalorder %s38, 0
      %p117 = por %p115, %p116
      %s119 = sadd.s32 %s118, 1
      %p122 = scmp.eq.s32.totalorder %s32, 1
      %p123 = scmp.ne.s32.totalorder %s118, %s120
      %p124 = scmp.eq.s32.totalorder %s32, 0
      %p125 = por %p123, %p124
      %p126 = scmp.ne.s32.totalorder %s118, %s120
      %p127 = scmp.eq.s32.totalorder %s37, 1
      %p128 = por %p126, %p127
      %p129 = scmp.ne.s32.totalorder %s120, %s121
      %p130 = scmp.eq.s32.totalorder %s37, 0
      %p131 = por %p129, %p130
      %p132 = scmp.ne.s32.totalorder %s120, %s121
      %p133 = scmp.eq.s32.totalorder %s38, 1
      %p134 = por %p132, %p133
      %p136 = scmp.ne.s32.totalorder %s121, %s135
      %p137 = scmp.eq.s32.totalorder %s38, 0
      %p138 = por %p136, %p137
      %s140 = sadd.s32 %s139, 1
      %p143 = scmp.eq.s32.totalorder %s32, 1
      %p144 = scmp.ne.s32.totalorder %s139, %s141
      %p145 = scmp.eq.s32.totalorder %s32, 0
      %p146 = por %p144, %p145
      %p147 = scmp.ne.s32.totalorder %s139, %s141
      %p148 = scmp.eq.s32.totalorder %s37, 1
      %p149 = por %p147, %p148
      %p150 = scmp.ne.s32.totalorder %s141, %s142
      %p151 = scmp.eq.s32.totalorder %s37, 0
      %p152 = por %p150, %p151
      %p153 = scmp.ne.s32.totalorder %s141, %s142
      %p154 = scmp.eq.s32.totalorder %s38, 1
      %p155 = por %p153, %p154
      %p157 = scmp.ne.s32.totalorder %s142, %s156
      %p158 = scmp.eq.s32.totalorder %s38, 0
      %p159 = por %p157, %p158
      %s161 = sadd.s32 %s160, 1
      %p164 = scmp.eq.s32.totalorder %s32, 1
      %p165 = scmp.ne.s32.totalorder %s160, %s162
      %p166 = scmp.eq.s32.totalorder %s32, 0
      %p167 = por %p165, %p166
      %p168 = scmp.ne.s32.totalorder %s160, %s162
      %p169 = scmp.eq.s32.totalorder %s37, 1
      %p170 = por %p168, %p169
      %p171 = scmp.ne.s32.totalorder %s162, %s163
      %p172 = scmp.eq.s32.totalorder %s37, 0
      %p173 = por %p171, %p172
      %p174 = scmp.ne.s32.totalorder %s162, %s163
      %p175 = scmp.eq.s32.totalorder %s38, 1
      %p176 = por %p174, %p175
      %p178 = scmp.ne.s32.totalorder %s163, %s177
      %p179 = scmp.eq.s32.totalorder %s38, 0
      %p180 = por %p178, %p179
      %s182 = sadd.s32 %s181, 1
      %p185 = scmp.eq.s32.totalorder %s32, 1
      %p186 = scmp.ne.s32.totalorder %s181, %s183
      %p187 = scmp.eq.s32.totalorder %s32, 0
      %p188 = por %p186, %p187
      %p189 = scmp.ne.s32.totalorder %s181, %s183
      %p190 = scmp.eq.s32.totalorder %s37, 1
      %p191 = por %p189, %p190
      %p192 = scmp.ne.s32.totalorder %s183, %s184
      %p193 = scmp.eq.s32.totalorder %s37, 0
      %p194 = por %p192, %p193
      %p195 = scmp.ne.s32.totalorder %s183, %s184
      %p196 = scmp.eq.s32.totalorder %s38, 1
      %p197 = por %p195, %p196
      %p199 = scmp.ne.s32.totalorder %s184, %s198
      %p200 = scmp.eq.s32.totalorder %s38, 0
      %p201 = por %p199, %p200
      %s203 = sadd.s32 %s202, 1
      %p206 = scmp.eq.s32.totalorder %s32, 1
      %p207 = scmp.ne.s32.totalorder %s202, %s204
      %p208 = scmp.eq.s32.totalorder %s32, 0
      %p209 = por %p207, %p208
      %p210 = scmp.ne.s32.totalorder %s202, %s204
      %p211 = scmp.eq.s32.totalorder %s37, 1
      %p212 = por %p210, %p211
      %p213 = scmp.ne.s32.totalorder %s204, %s205
      %p214 = scmp.eq.s32.totalorder %s37, 0
      %p215 = por %p213, %p214
      %p216 = scmp.ne.s32.totalorder %s204, %s205
      %p217 = scmp.eq.s32.totalorder %s38, 1
      %p218 = por %p216, %p217
      %p220 = scmp.ne.s32.totalorder %s205, %s219
      %p221 = scmp.eq.s32.totalorder %s38, 0
      %p222 = por %p220, %p221
      %s224 = sadd.s32 %s223, 1
      %p227 = scmp.eq.s32.totalorder %s32, 1
      %p228 = scmp.ne.s32.totalorder %s223, %s225
      %p229 = scmp.eq.s32.totalorder %s32, 0
      %p230 = por %p228, %p229
      %p231 = scmp.ne.s32.totalorder %s223, %s225
      %p232 = scmp.eq.s32.totalorder %s37, 1
      %p233 = por %p231, %p232
      %p234 = scmp.ne.s32.totalorder %s225, %s226
      %p235 = scmp.eq.s32.totalorder %s37, 0
      %p236 = por %p234, %p235
      %p237 = scmp.ne.s32.totalorder %s225, %s226
      %p238 = scmp.eq.s32.totalorder %s38, 1
      %p239 = por %p237, %p238
      %p241 = scmp.ne.s32.totalorder %s226, %s240
      %p242 = scmp.eq.s32.totalorder %s38, 0
      %p243 = por %p241, %p242
      %s245 = sadd.s32 %s244, 1
      %p248 = scmp.eq.s32.totalorder %s32, 1
      %p249 = scmp.ne.s32.totalorder %s244, %s246
      %p250 = scmp.eq.s32.totalorder %s32, 0
      %p251 = por %p249, %p250
      %p252 = scmp.ne.s32.totalorder %s244, %s246
      %p253 = scmp.eq.s32.totalorder %s37, 1
      %p254 = por %p252, %p253
      %p255 = scmp.ne.s32.totalorder %s246, %s247
      %p256 = scmp.eq.s32.totalorder %s37, 0
      %p257 = por %p255, %p256
      %p258 = scmp.ne.s32.totalorder %s246, %s247
      %p259 = scmp.eq.s32.totalorder %s38, 1
      %p260 = por %p258, %p259
      %p262 = scmp.ne.s32.totalorder %s247, %s261
      %p263 = scmp.eq.s32.totalorder %s38, 0
      %p264 = por %p262, %p263
      %s266 = sadd.s32 %s265, 1
      %p269 = scmp.eq.s32.totalorder %s32, 1
      %p270 = scmp.ne.s32.totalorder %s265, %s267
      %p271 = scmp.eq.s32.totalorder %s32, 0
      %p272 = por %p270, %p271
      %p273 = scmp.ne.s32.totalorder %s265, %s267
      %p274 = scmp.eq.s32.totalorder %s37, 1
      %p275 = por %p273, %p274
      %p276 = scmp.ne.s32.totalorder %s267, %s268
      %p277 = scmp.eq.s32.totalorder %s37, 0
      %p278 = por %p276, %p277
      %p279 = scmp.ne.s32.totalorder %s267, %s268
      %p280 = scmp.eq.s32.totalorder %s38, 1
      %p281 = por %p279, %p280
      %p283 = scmp.ne.s32.totalorder %s268, %s282
      %p284 = scmp.eq.s32.totalorder %s38, 0
      %p285 = por %p283, %p284
      %s286 = ssub.s32 %s32, %s39
      %p287 = scmp.eq.s32.totalorder %s286, 0
      %s289 = sadd.s32 %s288, 1
      %s290 = scalar_select %p287, %s288, %s289
      %p293 = pneg %p287
      %p294 = scmp.eq.s32.totalorder %s32, 1
      %p295 = por %p293, %p294
      %p296 = scmp.ne.s32.totalorder %s288, %s291
      %p297 = scmp.eq.s32.totalorder %s32, 0
      %p298 = por %p296, %p297
      %p299 = scmp.ne.s32.totalorder %s288, %s291
      %p300 = scmp.eq.s32.totalorder %s37, 1
      %p301 = por %p299, %p300
      %p302 = scmp.ne.s32.totalorder %s291, %s292
      %p303 = scmp.eq.s32.totalorder %s37, 0
      %p304 = por %p302, %p303
      %p305 = scmp.ne.s32.totalorder %s291, %s292
      %p306 = scmp.eq.s32.totalorder %s38, 1
      %p307 = por %p305, %p306
      %p309 = scmp.ne.s32.totalorder %s292, %s308
      %p310 = scmp.eq.s32.totalorder %s38, 0
      %p311 = por %p309, %p310
      %s312 = ssub.s32 %s32, %s39
      %p313 = scmp.eq.s32.totalorder %s312, 0
      %s315 = sadd.s32 %s314, 1
      %s316 = scalar_select %p313, %s314, %s315
      %p319 = pneg %p313
      %p320 = scmp.eq.s32.totalorder %s32, 1
      %p321 = por %p319, %p320
      %p322 = scmp.ne.s32.totalorder %s314, %s317
      %p323 = scmp.eq.s32.totalorder %s32, 0
      %p324 = por %p322, %p323
      %p325 = scmp.ne.s32.totalorder %s314, %s317
      %p326 = scmp.eq.s32.totalorder %s37, 1
      %p327 = por %p325, %p326
      %p328 = scmp.ne.s32.totalorder %s317, %s318
      %p329 = scmp.eq.s32.totalorder %s37, 0
      %p330 = por %p328, %p329
      %p331 = scmp.ne.s32.totalorder %s317, %s318
      %p332 = scmp.eq.s32.totalorder %s38, 1
      %p333 = por %p331, %p332
      %p335 = scmp.ne.s32.totalorder %s318, %s334
      %p336 = scmp.eq.s32.totalorder %s38, 0
      %p337 = por %p335, %p336
      %p338 = scmp.le.s32.totalorder 1, %s32
      %p339 = scmp.lt.s32.totalorder %s32, 3
      %p340 = pnand %p338, %p339
      %p341 = pneg %p340
      // Predicated region
      $region9: #{tpu_custom_call.1} parent=5 // pred_check
        _
      $region10: #{tpu_custom_call.1} parent=5 // pred_check_branch
        %343 = sbr.rel (%p340) target = $region12
      $region11: #{tpu_custom_call.1} parent=5 // pred_region
        %s344 = ssub.s32 %s32, 1
        // Predicated region
        $region13: #{tpu_custom_call.1} parent=11 // pred_check
          %p345 = pneg %p131
        $region14: #{tpu_custom_call.1} parent=11 // pred_check_branch
          %347 = sbr.rel (%p345) target = $region16
        $region15: #{tpu_custom_call.1} parent=11 // pred_region
          _
        $region16: #{tpu_custom_call.1} parent=11 // pred_fallthru
          _
        // Predicated region
        $region17: #{tpu_custom_call.1} parent=11 // pred_check
          %p348 = pneg %p152
        $region18: #{tpu_custom_call.1} parent=11 // pred_check_branch
          %350 = sbr.rel (%p348) target = $region20
        $region19: #{tpu_custom_call.1} parent=11 // pred_region
          _
        $region20: #{tpu_custom_call.1} parent=11 // pred_fallthru
          _
        // Predicated region
        $region21: #{tpu_custom_call.1} parent=11 // pred_check
          %p351 = pneg %p173
        $region22: #{tpu_custom_call.1} parent=11 // pred_check_branch
          %353 = sbr.rel (%p351) target = $region24
        $region23: #{tpu_custom_call.1} parent=11 // pred_region
          _
        $region24: #{tpu_custom_call.1} parent=11 // pred_fallthru
          _
        // Predicated region
        $region25: #{tpu_custom_call.1} parent=11 // pred_check
          %p354 = pneg %p194
        $region26: #{tpu_custom_call.1} parent=11 // pred_check_branch
          %356 = sbr.rel (%p354) target = $region28
        $region27: #{tpu_custom_call.1} parent=11 // pred_region
          _
        $region28: #{tpu_custom_call.1} parent=11 // pred_fallthru
          _
        // Predicated region
        $region29: #{tpu_custom_call.1} parent=11 // pred_check
          %p357 = pneg %p215
        $region30: #{tpu_custom_call.1} parent=11 // pred_check_branch
          %359 = sbr.rel (%p357) target = $region32
        $region31: #{tpu_custom_call.1} parent=11 // pred_region
          _
        $region32: #{tpu_custom_call.1} parent=11 // pred_fallthru
          _
        // Predicated region
        $region33: #{tpu_custom_call.1} parent=11 // pred_check
          %p360 = pneg %p236
        $region34: #{tpu_custom_call.1} parent=11 // pred_check_branch
          %362 = sbr.rel (%p360) target = $region36
        $region35: #{tpu_custom_call.1} parent=11 // pred_region
          _
        $region36: #{tpu_custom_call.1} parent=11 // pred_fallthru
          _
        // Predicated region
        $region37: #{tpu_custom_call.1} parent=11 // pred_check
          %p363 = pneg %p257
        $region38: #{tpu_custom_call.1} parent=11 // pred_check_branch
          %365 = sbr.rel (%p363) target = $region40
        $region39: #{tpu_custom_call.1} parent=11 // pred_region
          _
        $region40: #{tpu_custom_call.1} parent=11 // pred_fallthru
          _
        // Predicated region
        $region41: #{tpu_custom_call.1} parent=11 // pred_check
          %p366 = pneg %p278
        $region42: #{tpu_custom_call.1} parent=11 // pred_check_branch
          %368 = sbr.rel (%p366) target = $region44
        $region43: #{tpu_custom_call.1} parent=11 // pred_region
          _
        $region44: #{tpu_custom_call.1} parent=11 // pred_fallthru
          _
      $region12: #{tpu_custom_call.1} parent=5 // pred_fallthru
        _
      %p369 = scmp.lt.s32.totalorder %s32, 2
      // Predicated region
      $region45: #{tpu_custom_call.1} parent=5 // pred_check
        %p370 = pneg %p369
      $region46: #{tpu_custom_call.1} parent=5 // pred_check_branch
        %372 = sbr.rel (%p370) target = $region48
      $region47: #{tpu_custom_call.1} parent=5 // pred_region
        // Predicated region
        $region49: #{tpu_custom_call.1} parent=47 // pred_check
          %p373 = pneg %p52
        $region50: #{tpu_custom_call.1} parent=47 // pred_check_branch
          %375 = sbr.rel (%p373) target = $region52
        $region51: #{tpu_custom_call.1} parent=47 // pred_region
          %p376 = scmp.lt.s32.totalorder %s32, 1
          %s377 = scalar_select %p376, %s32, 1
          %s378 = smul.addr %s377, 4
          %s379 = scalar_lea.vmem %s1, %s378
        $region52: #{tpu_custom_call.1} parent=47 // pred_fallthru
          _
        // Predicated region
        $region53: #{tpu_custom_call.1} parent=47 // pred_check
          %p380 = pneg %p78
        $region54: #{tpu_custom_call.1} parent=47 // pred_check_branch
          %382 = sbr.rel (%p380) target = $region56
        $region55: #{tpu_custom_call.1} parent=47 // pred_region
          %p383 = scmp.lt.s32.totalorder %s32, 1
          %s384 = scalar_select %p383, %s32, 1
          %s385 = smul.addr %s384, 16
          %s386 = smul.addr %s385, 4
          %s387 = scalar_lea.vmem %s2, %s386
        $region56: #{tpu_custom_call.1} parent=47 // pred_fallthru
          _
        // Predicated region
        $region57: #{tpu_custom_call.1} parent=47 // pred_check
          %p388 = pneg %p104
        $region58: #{tpu_custom_call.1} parent=47 // pred_check_branch
          %390 = sbr.rel (%p388) target = $region60
        $region59: #{tpu_custom_call.1} parent=47 // pred_region
          %p391 = scmp.lt.s32.totalorder %s32, 1
          %s392 = scalar_select %p391, %s32, 1
          %s393 = smul.addr %s392, 16
          %s394 = smul.addr %s393, 4
          %s395 = scalar_lea.vmem %s3, %s394
        $region60: #{tpu_custom_call.1} parent=47 // pred_fallthru
          _
      $region48: #{tpu_custom_call.1} parent=5 // pred_fallthru
        _
      %p396 = scmp.le.s32.totalorder 1, %s32
      %p397 = scmp.lt.s32.totalorder %s32, 3
      %p398 = pnand %p396, %p397
      %p399 = pneg %p398
      // Predicated region
      $region61: #{tpu_custom_call.1} parent=5 // pred_check
        _
      $region62: #{tpu_custom_call.1} parent=5 // pred_check_branch
        %401 = sbr.rel (%p398) target = $region64
      $region63: #{tpu_custom_call.1} parent=5 // pred_region
        %s402 = ssub.s32 %s32, 1
        %p403 = scmp.lt.s32.totalorder %s37, 1
        %s404 = scalar_select %p403, %s37, 1
        %s405 = smul.addr %s404, 4
        %s406 = scalar_lea.vmem %s1, %s405
        %p407 = pneg %p58
        %p408 = pneg %p55
        %p409 = scmp.lt.s32.totalorder %s37, 1
        %s410 = scalar_select %p409, %s37, 1
        %s411 = smul.addr %s410, 16
        %s412 = smul.addr %s411, 4
        %s413 = scalar_lea.vmem %s2, %s412
        %p414 = pneg %p84
        %p415 = pneg %p81
        %p416 = scmp.lt.s32.totalorder %s37, 1
        %s417 = scalar_select %p416, %s37, 1
        %s418 = smul.addr %s417, 16
        %s419 = smul.addr %s418, 4
        %s420 = scalar_lea.vmem %s3, %s419
        %p421 = pneg %p110
        %p422 = pneg %p107
        %p423 = pneg %p131
        %p424 = pneg %p128
        %p425 = pneg %p152
        %p426 = pneg %p149
        %p427 = pneg %p173
        %p428 = pneg %p170
        %p429 = pneg %p194
        %p430 = pneg %p191
        %p431 = pneg %p215
        %p432 = pneg %p212
        %p433 = pneg %p236
        %p434 = pneg %p233
        %p435 = pneg %p257
        %p436 = pneg %p254
        %p437 = pneg %p278
        %p438 = pneg %p275
        %p439 = pneg %p304
        %p440 = pneg %p301
        %s441 = sand.u32 %s291, 1
        %s442 = scalar_lea.sflag [#allocation6], %s441
        %s443 = sand.u32 %s291, 1
        %s444 = smul.addr %s443, 8
        %s445 = scalar_lea.vmem [#allocation5], %s444
        %p446 = pneg %p330
        %p447 = pneg %p327
        %s448 = sand.u32 %s317, 1
        %s449 = scalar_lea.sflag [#allocation8], %s448
        %s450 = sand.u32 %s317, 1
        %s451 = smul.addr %s450, 8
        %s452 = scalar_lea.vmem [#allocation7], %s451
        %p453 = scmp.lt.s32.totalorder %s37, 1
        %s454 = scalar_select %p453, %s37, 1
        %s455 = smul.addr %s454, 4
        %s456 = scalar_lea.vmem %s1, %s455
        %p457 = scmp.lt.s32.totalorder %s37, 1
        %s458 = scalar_select %p457, %s37, 1
        %s459 = smul.addr %s458, 16
        %s460 = smul.addr %s459, 4
        %s461 = scalar_lea.vmem %s2, %s460
        %p462 = scmp.lt.s32.totalorder %s37, 1
        %s463 = scalar_select %p462, %s37, 1
        %s464 = smul.addr %s463, 16
        %s465 = smul.addr %s464, 4
        %s466 = scalar_lea.vmem %s3, %s465
        %s468 = sld [smem:[#allocation4 + %s37]]
        %v469 = vld [vmem:[%s456] sm:$0xf]
        %v470 = vld [vmem:[%s461] sm:$0xf]
        %v471 = vld [vmem:[%s461 + $0x4] sm:$0xf]
        %v472 = vld [vmem:[%s461 + $0x8] sm:$0xf]
        %v473 = vld [vmem:[%s461 + $0xc] sm:$0xf]
        %v474 = vld [vmem:[%s461 + $0x10] sm:$0xf]
        %v475 = vld [vmem:[%s461 + $0x14] sm:$0xf]
        %v476 = vld [vmem:[%s461 + $0x18] sm:$0xf]
        %v477 = vld [vmem:[%s461 + $0x1c] sm:$0xf]
        %v478 = vld [vmem:[%s461 + $0x20] sm:$0xf]
        %v479 = vld [vmem:[%s461 + $0x24] sm:$0xf]
        %v480 = vld [vmem:[%s461 + $0x28] sm:$0xf]
        %v481 = vld [vmem:[%s461 + $0x2c] sm:$0xf]
        %v482 = vld [vmem:[%s461 + $0x30] sm:$0xf]
        %v483 = vld [vmem:[%s461 + $0x34] sm:$0xf]
        %v484 = vld [vmem:[%s461 + $0x38] sm:$0xf]
        %v485 = vld [vmem:[%s461 + $0x3c] sm:$0xf]
        %v486 = vld [vmem:[%s466] sm:$0xf]
        %v487 = vld [vmem:[%s466 + $0x4] sm:$0xf]
        %v488 = vld [vmem:[%s466 + $0x8] sm:$0xf]
        %v489 = vld [vmem:[%s466 + $0xc] sm:$0xf]
        %v490 = vld [vmem:[%s466 + $0x10] sm:$0xf]
        %v491 = vld [vmem:[%s466 + $0x14] sm:$0xf]
        %v492 = vld [vmem:[%s466 + $0x18] sm:$0xf]
        %v493 = vld [vmem:[%s466 + $0x1c] sm:$0xf]
        %v494 = vld [vmem:[%s466 + $0x20] sm:$0xf]
        %v495 = vld [vmem:[%s466 + $0x24] sm:$0xf]
        %v496 = vld [vmem:[%s466 + $0x28] sm:$0xf]
        %v497 = vld [vmem:[%s466 + $0x2c] sm:$0xf]
        %v498 = vld [vmem:[%s466 + $0x30] sm:$0xf]
        %v499 = vld [vmem:[%s466 + $0x34] sm:$0xf]
        %v500 = vld [vmem:[%s466 + $0x38] sm:$0xf]
        %v501 = vld [vmem:[%s466 + $0x3c] sm:$0xf]
        %v502 = vld [vmem:[%s4] sm:$0xf]
        %v503 = vld [vmem:[%s4 + $0x4] sm:$0xf]
        %v504 = vld [vmem:[%s4 + $0x8] sm:$0xf]
        %v505 = vld [vmem:[%s4 + $0xc] sm:$0xf]
        %v506 = vld [vmem:[%s8] sm:$0x1]
        %v508 = vlaneseq
        %v509 = vshrl.u32 %v508, 7
        %v510 = vsub.s32 0, %v509
        %v511 = vrot.slane %v506, %v510
        %v517 = vunpack.c.l.b16 %v502
        %v518 = vunpack.c.l.b16 %v503
        %v519 = vunpack.c.l.b16 %v504
        %v520 = vunpack.c.l.b16 %v505
        %v521 = vpack.c.b16 %v518, %v517
        %v522 = vpack.c.b16 %v520, %v519
        %vm525 = vcmask 261120
        %v527 = vsel %vm525, %v469, 0
        %529 = vmatprep.subr.bf16.mxu0 0
        %530 = vmatpush1.bf16.msra.mxu0 %v521
        %531 = vmatprep.subr.bf16.mxu0 0
        %532 = vmatpush1.bf16.msra.mxu0 %v522
        %533 = vmatprep.subr.bf16.mxu0 0
        %534 = vmatpush1.bf16.msra.mxu0 0
        %535 = vmatprep.subr.bf16.mxu0 0
        %536 = vmatpush1.bf16.msra.mxu0 0
        %537 = vmatprep.subr.bf16.mxu0 0
        %538 = vmatpush1.bf16.msra.mxu0 0
        %539 = vmatprep.subr.bf16.mxu0 0
        %540 = vmatpush1.bf16.msra.mxu0 0
        %541 = vmatprep.subr.bf16.mxu0 0
        %542 = vmatpush1.bf16.msra.mxu0 0
        %543 = vmatprep.subr.bf16.mxu0 0
        %544 = vmatpush1.bf16.msra.mxu0 0
        %545 = vmatprep.subr.bf16.mxu0 0
        %546 = vmatpush1.bf16.msra.mxu0 0
        %547 = vmatprep.subr.bf16.mxu0 0
        %548 = vmatpush1.bf16.msra.mxu0 0
        %549 = vmatprep.subr.bf16.mxu0 0
        %550 = vmatpush1.bf16.msra.mxu0 0
        %551 = vmatprep.subr.bf16.mxu0 0
        %552 = vmatpush1.bf16.msra.mxu0 0
        %553 = vmatprep.subr.bf16.mxu0 0
        %554 = vmatpush1.bf16.msra.mxu0 0
        %555 = vmatprep.subr.bf16.mxu0 0
        %556 = vmatpush1.bf16.msra.mxu0 0
        %557 = vmatprep.subr.bf16.mxu0 0
        %558 = vmatpush1.bf16.msra.mxu0 0
        %559 = vmatprep.subr.bf16.mxu0 0
        %560 = vmatpush1.bf16.msra.mxu0 0
        %561 = vmatprep.mubr.bf16.mxu0 0
        %562 = vmatmul.mubr.bf16.gmra.mrb[0].mxu0 %v527
        %v563 = vpop.f32.mrb[0].mxu0
        %v564 = vadd.f32 %v511, %v563
        %v565 = vpop.f32.mrb[0].mxu0
        %v566 = vpop.f32.mrb[0].mxu0
        %v567 = vpop.f32.mrb[0].mxu0
        %568 = vdwg.mxu0
        %v569 = vpack.c.bf16 %v564, %v564
        %v570 = vld [vmem:[%s5] sm:$0xf]
        %v571 = vld [vmem:[%s5 + $0x4] sm:$0xf]
        %v572 = vld [vmem:[%s5 + $0x8] sm:$0xf]
        %v573 = vld [vmem:[%s5 + $0xc] sm:$0xf]
        %v574 = vld [vmem:[%s9] sm:$0x1]
        %v576 = vlaneseq
        %v577 = vshrl.u32 %v576, 7
        %v578 = vsub.s32 0, %v577
        %v579 = vrot.slane %v574, %v578
        %v597 = vunpack.c.l.b16 %v470
        %v598 = vunpack.c.l.b16 %v471
        %v599 = vunpack.c.l.b16 %v472
        %v600 = vunpack.c.l.b16 %v473
        %v601 = vunpack.c.l.b16 %v474
        %v602 = vunpack.c.l.b16 %v475
        %v603 = vunpack.c.l.b16 %v476
        %v604 = vunpack.c.l.b16 %v477
        %v605 = vunpack.c.l.b16 %v478
        %v606 = vunpack.c.l.b16 %v479
        %v607 = vunpack.c.l.b16 %v480
        %v608 = vunpack.c.l.b16 %v481
        %v609 = vunpack.c.l.b16 %v482
        %v610 = vunpack.c.l.b16 %v483
        %v611 = vunpack.c.l.b16 %v484
        %v612 = vunpack.c.l.b16 %v485
        %v613 = vpack.c.b16 %v598, %v597
        %v614 = vpack.c.b16 %v600, %v599
        %v615 = vpack.c.b16 %v602, %v601
        %v616 = vpack.c.b16 %v604, %v603
        %v617 = vpack.c.b16 %v606, %v605
        %v618 = vpack.c.b16 %v608, %v607
        %v619 = vpack.c.b16 %v610, %v609
        %v620 = vpack.c.b16 %v612, %v611
        %v625 = vunpack.c.l.b16 %v570
        %v626 = vunpack.c.l.b16 %v571
        %v627 = vunpack.c.l.b16 %v572
        %v628 = vunpack.c.l.b16 %v573
        %v629 = vpack.c.b16 %v626, %v625
        %v630 = vpack.c.b16 %v628, %v627
        %v634 = vsel %vm525, %v613, 0
        %v637 = vsel %vm525, %v614, 0
        %v640 = vsel %vm525, %v615, 0
        %v643 = vsel %vm525, %v616, 0
        %v646 = vsel %vm525, %v617, 0
        %v649 = vsel %vm525, %v618, 0
        %v652 = vsel %vm525, %v619, 0
        %v655 = vsel %vm525, %v620, 0
        %657 = vmatprep.subr.bf16.mxu0 0
        %658 = vmatpush1.bf16.msra.mxu0 %v629
        %659 = vmatprep.subr.bf16.mxu0 0
        %660 = vmatpush1.bf16.msra.mxu0 %v630
        %661 = vmatprep.subr.bf16.mxu0 0
        %662 = vmatpush1.bf16.msra.mxu0 0
        %663 = vmatprep.subr.bf16.mxu0 0
        %664 = vmatpush1.bf16.msra.mxu0 0
        %665 = vmatprep.subr.bf16.mxu0 0
        %666 = vmatpush1.bf16.msra.mxu0 0
        %667 = vmatprep.subr.bf16.mxu0 0
        %668 = vmatpush1.bf16.msra.mxu0 0
        %669 = vmatprep.subr.bf16.mxu0 0
        %670 = vmatpush1.bf16.msra.mxu0 0
        %671 = vmatprep.subr.bf16.mxu0 0
        %672 = vmatpush1.bf16.msra.mxu0 0
        %673 = vmatprep.subr.bf16.mxu0 0
        %674 = vmatpush1.bf16.msra.mxu0 0
        %675 = vmatprep.subr.bf16.mxu0 0
        %676 = vmatpush1.bf16.msra.mxu0 0
        %677 = vmatprep.subr.bf16.mxu0 0
        %678 = vmatpush1.bf16.msra.mxu0 0
        %679 = vmatprep.subr.bf16.mxu0 0
        %680 = vmatpush1.bf16.msra.mxu0 0
        %681 = vmatprep.subr.bf16.mxu0 0
        %682 = vmatpush1.bf16.msra.mxu0 0
        %683 = vmatprep.subr.bf16.mxu0 0
        %684 = vmatpush1.bf16.msra.mxu0 0
        %685 = vmatprep.subr.bf16.mxu0 0
        %686 = vmatpush1.bf16.msra.mxu0 0
        %687 = vmatprep.subr.bf16.mxu0 0
        %688 = vmatpush1.bf16.msra.mxu0 0
        %689 = vmatprep.mubr.bf16.mxu0 0
        %690 = vmatmul.mubr.bf16.gmra.mrb[0].mxu0 %v634
        %v691 = vpop.f32.mrb[0].mxu0
        %v692 = vadd.f32 %v579, %v691
        %v693 = vpop.f32.mrb[0].mxu0
        %v694 = vpop.f32.mrb[0].mxu0
        %v695 = vadd.f32 %v579, %v694
        %v696 = vpop.f32.mrb[0].mxu0
        %697 = vmatprep.mubr.bf16.mxu0 0
        %698 = vmatmul.mubr.bf16.gmra.mrb[0].mxu0 %v637
        %v699 = vpop.f32.mrb[0].mxu0
        %v700 = vadd.f32 %v579, %v699
        %v701 = vpop.f32.mrb[0].mxu0
        %v702 = vpop.f32.mrb[0].mxu0
        %v703 = vadd.f32 %v579, %v702
        %v704 = vpop.f32.mrb[0].mxu0
        %705 = vmatprep.mubr.bf16.mxu0 0
        %706 = vmatmul.mubr.bf16.gmra.mrb[0].mxu0 %v640
        %v707 = vpop.f32.mrb[0].mxu0
        %v708 = vadd.f32 %v579, %v707
        %v709 = vpop.f32.mrb[0].mxu0
        %v710 = vpop.f32.mrb[0].mxu0
        %v711 = vadd.f32 %v579, %v710
        %v712 = vpop.f32.mrb[0].mxu0
        %713 = vmatprep.mubr.bf16.mxu0 0
        %714 = vmatmul.mubr.bf16.gmra.mrb[0].mxu0 %v643
        %v715 = vpop.f32.mrb[0].mxu0
        %v716 = vadd.f32 %v579, %v715
        %v717 = vpop.f32.mrb[0].mxu0
        %v718 = vpop.f32.mrb[0].mxu0
        %v719 = vadd.f32 %v579, %v718
        %v720 = vpop.f32.mrb[0].mxu0
        %721 = vmatprep.mubr.bf16.mxu0 0
        %722 = vmatmul.mubr.bf16.gmra.mrb[0].mxu0 %v646
        %v723 = vpop.f32.mrb[0].mxu0
        %v724 = vadd.f32 %v579, %v723
        %v725 = vpop.f32.mrb[0].mxu0
        %v726 = vpop.f32.mrb[0].mxu0
        %v727 = vadd.f32 %v579, %v726
        %v728 = vpop.f32.mrb[0].mxu0
        %729 = vmatprep.mubr.bf16.mxu0 0
        %730 = vmatmul.mubr.bf16.gmra.mrb[0].mxu0 %v649
        %v731 = vpop.f32.mrb[0].mxu0
        %v732 = vadd.f32 %v579, %v731
        %v733 = vpop.f32.mrb[0].mxu0
        %v734 = vpop.f32.mrb[0].mxu0
        %v735 = vadd.f32 %v579, %v734
        %v736 = vpop.f32.mrb[0].mxu0
        %737 = vmatprep.mubr.bf16.mxu0 0
        %738 = vmatmul.mubr.bf16.gmra.mrb[0].mxu0 %v652
        %v739 = vpop.f32.mrb[0].mxu0
        %v740 = vadd.f32 %v579, %v739
        %v741 = vpop.f32.mrb[0].mxu0
        %v742 = vpop.f32.mrb[0].mxu0
        %v743 = vadd.f32 %v579, %v742
        %v744 = vpop.f32.mrb[0].mxu0
        %745 = vmatprep.mubr.bf16.mxu0 0
        %746 = vmatmul.mubr.bf16.gmra.mrb[0].mxu0 %v655
        %v747 = vpop.f32.mrb[0].mxu0
        %v748 = vadd.f32 %v579, %v747
        %v749 = vpop.f32.mrb[0].mxu0
        %v750 = vpop.f32.mrb[0].mxu0
        %v751 = vadd.f32 %v579, %v750
        %v752 = vpop.f32.mrb[0].mxu0
        %753 = vdwg.mxu0
        %v754 = vpack.c.bf16 %v695, %v692
        %v755 = vpack.c.bf16 %v703, %v700
        %v756 = vpack.c.bf16 %v711, %v708
        %v757 = vpack.c.bf16 %v719, %v716
        %v758 = vpack.c.bf16 %v727, %v724
        %v759 = vpack.c.bf16 %v735, %v732
        %v760 = vpack.c.bf16 %v743, %v740
        %v761 = vpack.c.bf16 %v751, %v748
        %v762 = vld [vmem:[%s6] sm:$0xf]
        %v763 = vld [vmem:[%s6 + $0x4] sm:$0xf]
        %v764 = vld [vmem:[%s6 + $0x8] sm:$0xf]
        %v765 = vld [vmem:[%s6 + $0xc] sm:$0xf]
        %v766 = vld [vmem:[%s10] sm:$0x1]
        %v768 = vlaneseq
        %v769 = vshrl.u32 %v768, 7
        %v770 = vsub.s32 0, %v769
        %v771 = vrot.slane %v766, %v770
        %v789 = vunpack.c.l.b16 %v486
        %v790 = vunpack.c.l.b16 %v487
        %v791 = vunpack.c.l.b16 %v488
        %v792 = vunpack.c.l.b16 %v489
        %v793 = vunpack.c.l.b16 %v490
        %v794 = vunpack.c.l.b16 %v491
        %v795 = vunpack.c.l.b16 %v492
        %v796 = vunpack.c.l.b16 %v493
        %v797 = vunpack.c.l.b16 %v494
        %v798 = vunpack.c.l.b16 %v495
        %v799 = vunpack.c.l.b16 %v496
        %v800 = vunpack.c.l.b16 %v497
        %v801 = vunpack.c.l.b16 %v498
        %v802 = vunpack.c.l.b16 %v499
        %v803 = vunpack.c.l.b16 %v500
        %v804 = vunpack.c.l.b16 %v501
        %v805 = vpack.c.b16 %v790, %v789
        %v806 = vpack.c.b16 %v792, %v791
        %v807 = vpack.c.b16 %v794, %v793
        %v808 = vpack.c.b16 %v796, %v795
        %v809 = vpack.c.b16 %v798, %v797
        %v810 = vpack.c.b16 %v800, %v799
        %v811 = vpack.c.b16 %v802, %v801
        %v812 = vpack.c.b16 %v804, %v803
        %v817 = vunpack.c.l.b16 %v762
        %v818 = vunpack.c.l.b16 %v763
        %v819 = vunpack.c.l.b16 %v764
        %v820 = vunpack.c.l.b16 %v765
        %v821 = vpack.c.b16 %v818, %v817
        %v822 = vpack.c.b16 %v820, %v819
        %v826 = vsel %vm525, %v805, 0
        %v829 = vsel %vm525, %v806, 0
        %v832 = vsel %vm525, %v807, 0
        %v835 = vsel %vm525, %v808, 0
        %v838 = vsel %vm525, %v809, 0
        %v841 = vsel %vm525, %v810, 0
        %v844 = vsel %vm525, %v811, 0
        %v847 = vsel %vm525, %v812, 0
        %849 = vmatprep.subr.bf16.mxu0 0
        %850 = vmatpush1.bf16.msra.mxu0 %v821
        %851 = vmatprep.subr.bf16.mxu0 0
        %852 = vmatpush1.bf16.msra.mxu0 %v822
        %853 = vmatprep.subr.bf16.mxu0 0
        %854 = vmatpush1.bf16.msra.mxu0 0
        %855 = vmatprep.subr.bf16.mxu0 0
        %856 = vmatpush1.bf16.msra.mxu0 0
        %857 = vmatprep.subr.bf16.mxu0 0
        %858 = vmatpush1.bf16.msra.mxu0 0
        %859 = vmatprep.subr.bf16.mxu0 0
        %860 = vmatpush1.bf16.msra.mxu0 0
        %861 = vmatprep.subr.bf16.mxu0 0
        %862 = vmatpush1.bf16.msra.mxu0 0
        %863 = vmatprep.subr.bf16.mxu0 0
        %864 = vmatpush1.bf16.msra.mxu0 0
        %865 = vmatprep.subr.bf16.mxu0 0
        %866 = vmatpush1.bf16.msra.mxu0 0
        %867 = vmatprep.subr.bf16.mxu0 0
        %868 = vmatpush1.bf16.msra.mxu0 0
        %869 = vmatprep.subr.bf16.mxu0 0
        %870 = vmatpush1.bf16.msra.mxu0 0
        %871 = vmatprep.subr.bf16.mxu0 0
        %872 = vmatpush1.bf16.msra.mxu0 0
        %873 = vmatprep.subr.bf16.mxu0 0
        %874 = vmatpush1.bf16.msra.mxu0 0
        %875 = vmatprep.subr.bf16.mxu0 0
        %876 = vmatpush1.bf16.msra.mxu0 0
        %877 = vmatprep.subr.bf16.mxu0 0
        %878 = vmatpush1.bf16.msra.mxu0 0
        %879 = vmatprep.subr.bf16.mxu0 0
        %880 = vmatpush1.bf16.msra.mxu0 0
        %881 = vmatprep.mubr.bf16.mxu0 0
        %882 = vmatmul.mubr.bf16.gmra.mrb[0].mxu0 %v826
        %v883 = vpop.f32.mrb[0].mxu0
        %v884 = vadd.f32 %v771, %v883
        %v885 = vpop.f32.mrb[0].mxu0
        %v886 = vpop.f32.mrb[0].mxu0
        %v887 = vadd.f32 %v771, %v886
        %v888 = vpop.f32.mrb[0].mxu0
        %889 = vmatprep.mubr.bf16.mxu0 0
        %890 = vmatmul.mubr.bf16.gmra.mrb[0].mxu0 %v829
        %v891 = vpop.f32.mrb[0].mxu0
        %v892 = vadd.f32 %v771, %v891
        %v893 = vpop.f32.mrb[0].mxu0
        %v894 = vpop.f32.mrb[0].mxu0
        %v895 = vadd.f32 %v771, %v894
        %v896 = vpop.f32.mrb[0].mxu0
        %897 = vmatprep.mubr.bf16.mxu0 0
        %898 = vmatmul.mubr.bf16.gmra.mrb[0].mxu0 %v832
        %v899 = vpop.f32.mrb[0].mxu0
        %v900 = vadd.f32 %v771, %v899
        %v901 = vpop.f32.mrb[0].mxu0
        %v902 = vpop.f32.mrb[0].mxu0
        %v903 = vadd.f32 %v771, %v902
        %v904 = vpop.f32.mrb[0].mxu0
        %905 = vmatprep.mubr.bf16.mxu0 0
        %906 = vmatmul.mubr.bf16.gmra.mrb[0].mxu0 %v835
        %v907 = vpop.f32.mrb[0].mxu0
        %v908 = vadd.f32 %v771, %v907
        %v909 = vpop.f32.mrb[0].mxu0
        %v910 = vpop.f32.mrb[0].mxu0
        %v911 = vadd.f32 %v771, %v910
        %v912 = vpop.f32.mrb[0].mxu0
        %913 = vmatprep.mubr.bf16.mxu0 0
        %914 = vmatmul.mubr.bf16.gmra.mrb[0].mxu0 %v838
        %v915 = vpop.f32.mrb[0].mxu0
        %v916 = vadd.f32 %v771, %v915
        %v917 = vpop.f32.mrb[0].mxu0
        %v918 = vpop.f32.mrb[0].mxu0
        %v919 = vadd.f32 %v771, %v918
        %v920 = vpop.f32.mrb[0].mxu0
        %921 = vmatprep.mubr.bf16.mxu0 0
        %922 = vmatmul.mubr.bf16.gmra.mrb[0].mxu0 %v841
        %v923 = vpop.f32.mrb[0].mxu0
        %v924 = vadd.f32 %v771, %v923
        %v925 = vpop.f32.mrb[0].mxu0
        %v926 = vpop.f32.mrb[0].mxu0
        %v927 = vadd.f32 %v771, %v926
        %v928 = vpop.f32.mrb[0].mxu0
        %929 = vmatprep.mubr.bf16.mxu0 0
        %930 = vmatmul.mubr.bf16.gmra.mrb[0].mxu0 %v844
        %v931 = vpop.f32.mrb[0].mxu0
        %v932 = vadd.f32 %v771, %v931
        %v933 = vpop.f32.mrb[0].mxu0
        %v934 = vpop.f32.mrb[0].mxu0
        %v935 = vadd.f32 %v771, %v934
        %v936 = vpop.f32.mrb[0].mxu0
        %937 = vmatprep.mubr.bf16.mxu0 0
        %938 = vmatmul.mubr.bf16.gmra.mrb[0].mxu0 %v847
        %v939 = vpop.f32.mrb[0].mxu0
        %v940 = vadd.f32 %v771, %v939
        %v941 = vpop.f32.mrb[0].mxu0
        %v942 = vpop.f32.mrb[0].mxu0
        %v943 = vadd.f32 %v771, %v942
        %v944 = vpop.f32.mrb[0].mxu0
        %945 = vdwg.mxu0
        %v946 = vpack.c.bf16 %v887, %v884
        %v947 = vpack.c.bf16 %v895, %v892
        %v948 = vpack.c.bf16 %v903, %v900
        %v949 = vpack.c.bf16 %v911, %v908
        %v950 = vpack.c.bf16 %v919, %v916
        %v951 = vpack.c.bf16 %v927, %v924
        %v952 = vpack.c.bf16 %v935, %v932
        %v953 = vpack.c.bf16 %v943, %v940
        %v954 = vlaneseq
        %v955 = vand.u32 %v954, 127
        %v956 = vstv %s468
        %vm957 = vcmp.ge.s32.totalorder %v955, %v956
        %v958 = vsel %vm957, -1e+30, 0.0
        %vm959 = vcmask 64512
        %v961 = vsel %vm959, %v569, 0
        %v964 = vsel %vm959, %v754, 0
        %v967 = vsel %vm959, %v755, 0
        %v970 = vsel %vm959, %v756, 0
        %v973 = vsel %vm959, %v757, 0
        %v976 = vsel %vm959, %v758, 0
        %v979 = vsel %vm959, %v759, 0
        %v982 = vsel %vm959, %v760, 0
        %v985 = vsel %vm959, %v761, 0
        %987 = vmatprep.subr.bf16.mxu0 0
        %988 = vmatpush1.bf16.xpose.msra.mxu0 %v964
        %989 = vmatprep.subr.bf16.mxu0 0
        %990 = vmatpush1.bf16.xpose.msra.mxu0 %v967
        %991 = vmatprep.subr.bf16.mxu0 0
        %992 = vmatpush1.bf16.xpose.msra.mxu0 %v970
        %993 = vmatprep.subr.bf16.mxu0 0
        %994 = vmatpush1.bf16.xpose.msra.mxu0 %v973
        %995 = vmatprep.subr.bf16.mxu0 0
        %996 = vmatpush1.bf16.xpose.msra.mxu0 %v976
        %997 = vmatprep.subr.bf16.mxu0 0
        %998 = vmatpush1.bf16.xpose.msra.mxu0 %v979
        %999 = vmatprep.subr.bf16.mxu0 0
        %1000 = vmatpush1.bf16.xpose.msra.mxu0 %v982
        %1001 = vmatprep.subr.bf16.mxu0 0
        %1002 = vmatpush1.bf16.xpose.msra.mxu0 %v985
        %1003 = vmatprep.subr.bf16.mxu0 0
        %1004 = vmatpush1.bf16.xpose.msra.mxu0 0
        %1005 = vmatprep.subr.bf16.mxu0 0
        %1006 = vmatpush1.bf16.xpose.msra.mxu0 0
        %1007 = vmatprep.subr.bf16.mxu0 0
        %1008 = vmatpush1.bf16.xpose.msra.mxu0 0
        %1009 = vmatprep.subr.bf16.mxu0 0
        %1010 = vmatpush1.bf16.xpose.msra.mxu0 0
        %1011 = vmatprep.subr.bf16.mxu0 0
        %1012 = vmatpush1.bf16.xpose.msra.mxu0 0
        %1013 = vmatprep.subr.bf16.mxu0 0
        %1014 = vmatpush1.bf16.xpose.msra.mxu0 0
        %1015 = vmatprep.subr.bf16.mxu0 0
        %1016 = vmatpush1.bf16.xpose.msra.mxu0 0
        %1017 = vmatprep.subr.bf16.mxu0 0
        %1018 = vmatpush1.bf16.xpose.msra.mxu0 0
        %1019 = vmatprep.mubr.bf16.mxu0 0
        %1020 = vmatmul.mubr.bf16.gmra.mrb[0].mxu0 %v961
        %v1021 = vpop.f32.mrb[0].mxu0
        %v1022 = vadd.f32 %v958, %v1021
        %v1023 = vpop.f32.mrb[0].mxu0
        %v1024 = vpop.f32.mrb[0].mxu0
        %v1025 = vpop.f32.mrb[0].mxu0
        %1026 = vdwg.mxu0
        %1027 = vmax.xlane.f32.xlu0 %v1022
        %v1028 = vpop.xlane.xlu0 %1027
        %v1029 = vsub.f32 %v1022, %v1028
        %v1030 = vmul.f32 %v1029, 1.442695
        %v1031 = vpow.pop %v1030
        %1032 = vadd.xlane.f32.xlu0 %v1031
        %v1033 = vpop.xlane.xlu0 %1032
        %v1034 = vrcp.pop %v1033
        %v1035 = vmul.f32 %v1031, %v1034
        %v1036 = vpack.c.bf16 %v1035, %v1035
        %1037 = vmatprep.subr.bf16.mxu0 0
        %1038 = vmatpush1.bf16.msra.mxu0 %v946
        %1039 = vmatprep.subr.bf16.mxu0 0
        %1040 = vmatpush1.bf16.msra.mxu0 %v947
        %1041 = vmatprep.subr.bf16.mxu0 0
        %1042 = vmatpush1.bf16.msra.mxu0 %v948
        %1043 = vmatprep.subr.bf16.mxu0 0
        %1044 = vmatpush1.bf16.msra.mxu0 %v949
        %1045 = vmatprep.subr.bf16.mxu0 0
        %1046 = vmatpush1.bf16.msra.mxu0 %v950
        %1047 = vmatprep.subr.bf16.mxu0 0
        %1048 = vmatpush1.bf16.msra.mxu0 %v951
        %1049 = vmatprep.subr.bf16.mxu0 0
        %1050 = vmatpush1.bf16.msra.mxu0 %v952
        %1051 = vmatprep.subr.bf16.mxu0 0
        %1052 = vmatpush1.bf16.msra.mxu0 %v953
        %1053 = vmatprep.subr.bf16.mxu0 0
        %1054 = vmatpush1.bf16.msra.mxu0 0
        %1055 = vmatprep.subr.bf16.mxu0 0
        %1056 = vmatpush1.bf16.msra.mxu0 0
        %1057 = vmatprep.subr.bf16.mxu0 0
        %1058 = vmatpush1.bf16.msra.mxu0 0
        %1059 = vmatprep.subr.bf16.mxu0 0
        %1060 = vmatpush1.bf16.msra.mxu0 0
        %1061 = vmatprep.subr.bf16.mxu0 0
        %1062 = vmatpush1.bf16.msra.mxu0 0
        %1063 = vmatprep.subr.bf16.mxu0 0
        %1064 = vmatpush1.bf16.msra.mxu0 0
        %1065 = vmatprep.subr.bf16.mxu0 0
        %1066 = vmatpush1.bf16.msra.mxu0 0
        %1067 = vmatprep.subr.bf16.mxu0 0
        %1068 = vmatpush1.bf16.msra.mxu0 0
        %1069 = vmatprep.mubr.bf16.mxu0 0
        %1070 = vmatmul.mubr.bf16.gmra.mrb[0].mxu0 %v1036
        %v1071 = vpop.f32.mrb[0].mxu0
        %v1072 = vadd.f32 0.0, %v1071
        %v1073 = vpop.f32.mrb[0].mxu0
        %v1074 = vpop.f32.mrb[0].mxu0
        %v1075 = vpop.f32.mrb[0].mxu0
        %1076 = vdwg.mxu0
        %1077 = vst.msk [vmem:[#allocation2] sm:$0xff] %vm959, %v1072
        %v1078 = vadd.f32 %v1035, 0.0
        %1080 = vrot.lane.b32.xlu0 %v569, 120
        %v1081 = vpop.permute.xlu0 %1080
        %1090 = vrot.lane.b32.xlu0 %v754, 120
        %v1091 = vpop.permute.xlu0 %1090
        %1092 = vrot.lane.b32.xlu0 %v755, 120
        %v1093 = vpop.permute.xlu0 %1092
        %1094 = vrot.lane.b32.xlu0 %v756, 120
        %v1095 = vpop.permute.xlu0 %1094
        %1096 = vrot.lane.b32.xlu0 %v757, 120
        %v1097 = vpop.permute.xlu0 %1096
        %1098 = vrot.lane.b32.xlu0 %v758, 120
        %v1099 = vpop.permute.xlu0 %1098
        %1100 = vrot.lane.b32.xlu0 %v759, 120
        %v1101 = vpop.permute.xlu0 %1100
        %1102 = vrot.lane.b32.xlu0 %v760, 120
        %v1103 = vpop.permute.xlu0 %1102
        %1104 = vrot.lane.b32.xlu0 %v761, 120
        %v1105 = vpop.permute.xlu0 %1104
        %v1107 = vsel %vm959, %v1081, 0
        %v1110 = vsel %vm959, %v1091, 0
        %v1113 = vsel %vm959, %v1093, 0
        %v1116 = vsel %vm959, %v1095, 0
        %v1119 = vsel %vm959, %v1097, 0
        %v1122 = vsel %vm959, %v1099, 0
        %v1125 = vsel %vm959, %v1101, 0
        %v1128 = vsel %vm959, %v1103, 0
        %v1131 = vsel %vm959, %v1105, 0
        %1133 = vmatprep.subr.bf16.mxu0 0
        %1134 = vmatpush1.bf16.xpose.msra.mxu0 %v1110
        %1135 = vmatprep.subr.bf16.mxu0 0
        %1136 = vmatpush1.bf16.xpose.msra.mxu0 %v1113
        %1137 = vmatprep.subr.bf16.mxu0 0
        %1138 = vmatpush1.bf16.xpose.msra.mxu0 %v1116
        %1139 = vmatprep.subr.bf16.mxu0 0
        %1140 = vmatpush1.bf16.xpose.msra.mxu0 %v1119
        %1141 = vmatprep.subr.bf16.mxu0 0
        %1142 = vmatpush1.bf16.xpose.msra.mxu0 %v1122
        %1143 = vmatprep.subr.bf16.mxu0 0
        %1144 = vmatpush1.bf16.xpose.msra.mxu0 %v1125
        %1145 = vmatprep.subr.bf16.mxu0 0
        %1146 = vmatpush1.bf16.xpose.msra.mxu0 %v1128
        %1147 = vmatprep.subr.bf16.mxu0 0
        %1148 = vmatpush1.bf16.xpose.msra.mxu0 %v1131
        %1149 = vmatprep.subr.bf16.mxu0 0
        %1150 = vmatpush1.bf16.xpose.msra.mxu0 0
        %1151 = vmatprep.subr.bf16.mxu0 0
        %1152 = vmatpush1.bf16.xpose.msra.mxu0 0
        %1153 = vmatprep.subr.bf16.mxu0 0
        %1154 = vmatpush1.bf16.xpose.msra.mxu0 0
        %1155 = vmatprep.subr.bf16.mxu0 0
        %1156 = vmatpush1.bf16.xpose.msra.mxu0 0
        %1157 = vmatprep.subr.bf16.mxu0 0
        %1158 = vmatpush1.bf16.xpose.msra.mxu0 0
        %1159 = vmatprep.subr.bf16.mxu0 0
        %1160 = vmatpush1.bf16.xpose.msra.mxu0 0
        %1161 = vmatprep.subr.bf16.mxu0 0
        %1162 = vmatpush1.bf16.xpose.msra.mxu0 0
        %1163 = vmatprep.subr.bf16.mxu0 0
        %1164 = vmatpush1.bf16.xpose.msra.mxu0 0
        %1165 = vmatprep.mubr.bf16.mxu0 0
        %1166 = vmatmul.mubr.bf16.gmra.mrb[0].mxu0 %v1107
        %v1167 = vpop.f32.mrb[0].mxu0
        %v1168 = vadd.f32 %v958, %v1167
        %v1169 = vpop.f32.mrb[0].mxu0
        %v1170 = vpop.f32.mrb[0].mxu0
        %v1171 = vpop.f32.mrb[0].mxu0
        %1172 = vdwg.mxu0
        %1173 = vmax.xlane.f32.xlu0 %v1168
        %v1174 = vpop.xlane.xlu0 %1173
        %v1175 = vsub.f32 %v1168, %v1174
        %v1176 = vmul.f32 %v1175, 1.442695
        %v1177 = vpow.pop %v1176
        %1178 = vadd.xlane.f32.xlu0 %v1177
        %v1179 = vpop.xlane.xlu0 %1178
        %v1180 = vrcp.pop %v1179
        %v1181 = vmul.f32 %v1177, %v1180
        %v1182 = vpack.c.bf16 %v1181, %v1181
        %1191 = vrot.lane.b32.xlu0 %v946, 120
        %v1192 = vpop.permute.xlu0 %1191
        %1193 = vrot.lane.b32.xlu0 %v947, 120
        %v1194 = vpop.permute.xlu0 %1193
        %1195 = vrot.lane.b32.xlu0 %v948, 120
        %v1196 = vpop.permute.xlu0 %1195
        %1197 = vrot.lane.b32.xlu0 %v949, 120
        %v1198 = vpop.permute.xlu0 %1197
        %1199 = vrot.lane.b32.xlu0 %v950, 120
        %v1200 = vpop.permute.xlu0 %1199
        %1201 = vrot.lane.b32.xlu0 %v951, 120
        %v1202 = vpop.permute.xlu0 %1201
        %1203 = vrot.lane.b32.xlu0 %v952, 120
        %v1204 = vpop.permute.xlu0 %1203
        %1205 = vrot.lane.b32.xlu0 %v953, 120
        %v1206 = vpop.permute.xlu0 %1205
        %1215 = vmatprep.subr.bf16.mxu0 0
        %1216 = vmatpush1.bf16.msra.mxu0 %v1192
        %1217 = vmatprep.subr.bf16.mxu0 0
        %1218 = vmatpush1.bf16.msra.mxu0 %v1194
        %1219 = vmatprep.subr.bf16.mxu0 0
        %1220 = vmatpush1.bf16.msra.mxu0 %v1196
        %1221 = vmatprep.subr.bf16.mxu0 0
        %1222 = vmatpush1.bf16.msra.mxu0 %v1198
        %1223 = vmatprep.subr.bf16.mxu0 0
        %1224 = vmatpush1.bf16.msra.mxu0 %v1200
        %1225 = vmatprep.subr.bf16.mxu0 0
        %1226 = vmatpush1.bf16.msra.mxu0 %v1202
        %1227 = vmatprep.subr.bf16.mxu0 0
        %1228 = vmatpush1.bf16.msra.mxu0 %v1204
        %1229 = vmatprep.subr.bf16.mxu0 0
        %1230 = vmatpush1.bf16.msra.mxu0 %v1206
        %1231 = vmatprep.subr.bf16.mxu0 0
        %1232 = vmatpush1.bf16.msra.mxu0 0
        %1233 = vmatprep.subr.bf16.mxu0 0
        %1234 = vmatpush1.bf16.msra.mxu0 0
        %1235 = vmatprep.subr.bf16.mxu0 0
        %1236 = vmatpush1.bf16.msra.mxu0 0
        %1237 = vmatprep.subr.bf16.mxu0 0
        %1238 = vmatpush1.bf16.msra.mxu0 0
        %1239 = vmatprep.subr.bf16.mxu0 0
        %1240 = vmatpush1.bf16.msra.mxu0 0
        %1241 = vmatprep.subr.bf16.mxu0 0
        %1242 = vmatpush1.bf16.msra.mxu0 0
        %1243 = vmatprep.subr.bf16.mxu0 0
        %1244 = vmatpush1.bf16.msra.mxu0 0
        %1245 = vmatprep.subr.bf16.mxu0 0
        %1246 = vmatpush1.bf16.msra.mxu0 0
        %1247 = vmatprep.mubr.bf16.mxu0 0
        %1248 = vmatmul.mubr.bf16.gmra.mrb[0].mxu0 %v1182
        %v1249 = vpop.f32.mrb[0].mxu0
        %v1250 = vadd.f32 0.0, %v1249
        %v1251 = vpop.f32.mrb[0].mxu0
        %v1252 = vpop.f32.mrb[0].mxu0
        %v1253 = vpop.f32.mrb[0].mxu0
        %1254 = vdwg.mxu0
        %1256 = vrot.lane.b32.xlu0 %v1250, 8
        %v1257 = vpop.permute.xlu0 %1256
        %vm1259 = vcmask 130112
        %1260 = vst.msk [vmem:[#allocation2] sm:$0xff] %vm1259, %v1257
        %v1261 = vadd.f32 %v1078, %v1181
        %1262 = vrot.lane.b32.xlu0 %v569, 112
        %v1263 = vpop.permute.xlu0 %1262
        %1264 = vrot.lane.b32.xlu0 %v754, 112
        %v1265 = vpop.permute.xlu0 %1264
        %1266 = vrot.lane.b32.xlu0 %v755, 112
        %v1267 = vpop.permute.xlu0 %1266
        %1268 = vrot.lane.b32.xlu0 %v756, 112
        %v1269 = vpop.permute.xlu0 %1268
        %1270 = vrot.lane.b32.xlu0 %v757, 112
        %v1271 = vpop.permute.xlu0 %1270
        %1272 = vrot.lane.b32.xlu0 %v758, 112
        %v1273 = vpop.permute.xlu0 %1272
        %1274 = vrot.lane.b32.xlu0 %v759, 112
        %v1275 = vpop.permute.xlu0 %1274
        %1276 = vrot.lane.b32.xlu0 %v760, 112
        %v1277 = vpop.permute.xlu0 %1276
        %1278 = vrot.lane.b32.xlu0 %v761, 112
        %v1279 = vpop.permute.xlu0 %1278
        %v1281 = vsel %vm959, %v1263, 0
        %v1284 = vsel %vm959, %v1265, 0
        %v1287 = vsel %vm959, %v1267, 0
        %v1290 = vsel %vm959, %v1269, 0
        %v1293 = vsel %vm959, %v1271, 0
        %v1296 = vsel %vm959, %v1273, 0
        %v1299 = vsel %vm959, %v1275, 0
        %v1302 = vsel %vm959, %v1277, 0
        %v1305 = vsel %vm959, %v1279, 0
        %1307 = vmatprep.subr.bf16.mxu0 0
        %1308 = vmatpush1.bf16.xpose.msra.mxu0 %v1284
        %1309 = vmatprep.subr.bf16.mxu0 0
        %1310 = vmatpush1.bf16.xpose.msra.mxu0 %v1287
        %1311 = vmatprep.subr.bf16.mxu0 0
        %1312 = vmatpush1.bf16.xpose.msra.mxu0 %v1290
        %1313 = vmatprep.subr.bf16.mxu0 0
        %1314 = vmatpush1.bf16.xpose.msra.mxu0 %v1293
        %1315 = vmatprep.subr.bf16.mxu0 0
        %1316 = vmatpush1.bf16.xpose.msra.mxu0 %v1296
        %1317 = vmatprep.subr.bf16.mxu0 0
        %1318 = vmatpush1.bf16.xpose.msra.mxu0 %v1299
        %1319 = vmatprep.subr.bf16.mxu0 0
        %1320 = vmatpush1.bf16.xpose.msra.mxu0 %v1302
        %1321 = vmatprep.subr.bf16.mxu0 0
        %1322 = vmatpush1.bf16.xpose.msra.mxu0 %v1305
        %1323 = vmatprep.subr.bf16.mxu0 0
        %1324 = vmatpush1.bf16.xpose.msra.mxu0 0
        %1325 = vmatprep.subr.bf16.mxu0 0
        %1326 = vmatpush1.bf16.xpose.msra.mxu0 0
        %1327 = vmatprep.subr.bf16.mxu0 0
        %1328 = vmatpush1.bf16.xpose.msra.mxu0 0
        %1329 = vmatprep.subr.bf16.mxu0 0
        %1330 = vmatpush1.bf16.xpose.msra.mxu0 0
        %1331 = vmatprep.subr.bf16.mxu0 0
        %1332 = vmatpush1.bf16.xpose.msra.mxu0 0
        %1333 = vmatprep.subr.bf16.mxu0 0
        %1334 = vmatpush1.bf16.xpose.msra.mxu0 0
        %1335 = vmatprep.subr.bf16.mxu0 0
        %1336 = vmatpush1.bf16.xpose.msra.mxu0 0
        %1337 = vmatprep.subr.bf16.mxu0 0
        %1338 = vmatpush1.bf16.xpose.msra.mxu0 0
        %1339 = vmatprep.mubr.bf16.mxu0 0
        %1340 = vmatmul.mubr.bf16.gmra.mrb[0].mxu0 %v1281
        %v1341 = vpop.f32.mrb[0].mxu0
        %v1342 = vadd.f32 %v958, %v1341
        %v1343 = vpop.f32.mrb[0].mxu0
        %v1344 = vpop.f32.mrb[0].mxu0
        %v1345 = vpop.f32.mrb[0].mxu0
        %1346 = vdwg.mxu0
        %1347 = vmax.xlane.f32.xlu0 %v1342
        %v1348 = vpop.xlane.xlu0 %1347
        %v1349 = vsub.f32 %v1342, %v1348
        %v1350 = vmul.f32 %v1349, 1.442695
        %v1351 = vpow.pop %v1350
        %1352 = vadd.xlane.f32.xlu0 %v1351
        %v1353 = vpop.xlane.xlu0 %1352
        %v1354 = vrcp.pop %v1353
        %v1355 = vmul.f32 %v1351, %v1354
        %v1356 = vpack.c.bf16 %v1355, %v1355
        %1357 = vrot.lane.b32.xlu0 %v946, 112
        %v1358 = vpop.permute.xlu0 %1357
        %1359 = vrot.lane.b32.xlu0 %v947, 112
        %v1360 = vpop.permute.xlu0 %1359
        %1361 = vrot.lane.b32.xlu0 %v948, 112
        %v1362 = vpop.permute.xlu0 %1361
        %1363 = vrot.lane.b32.xlu0 %v949, 112
        %v1364 = vpop.permute.xlu0 %1363
        %1365 = vrot.lane.b32.xlu0 %v950, 112
        %v1366 = vpop.permute.xlu0 %1365
        %1367 = vrot.lane.b32.xlu0 %v951, 112
        %v1368 = vpop.permute.xlu0 %1367
        %1369 = vrot.lane.b32.xlu0 %v952, 112
        %v1370 = vpop.permute.xlu0 %1369
        %1371 = vrot.lane.b32.xlu0 %v953, 112
        %v1372 = vpop.permute.xlu0 %1371
        %1381 = vmatprep.subr.bf16.mxu0 0
        %1382 = vmatpush1.bf16.msra.mxu0 %v1358
        %1383 = vmatprep.subr.bf16.mxu0 0
        %1384 = vmatpush1.bf16.msra.mxu0 %v1360
        %1385 = vmatprep.subr.bf16.mxu0 0
        %1386 = vmatpush1.bf16.msra.mxu0 %v1362
        %1387 = vmatprep.subr.bf16.mxu0 0
        %1388 = vmatpush1.bf16.msra.mxu0 %v1364
        %1389 = vmatprep.subr.bf16.mxu0 0
        %1390 = vmatpush1.bf16.msra.mxu0 %v1366
        %1391 = vmatprep.subr.bf16.mxu0 0
        %1392 = vmatpush1.bf16.msra.mxu0 %v1368
        %1393 = vmatprep.subr.bf16.mxu0 0
        %1394 = vmatpush1.bf16.msra.mxu0 %v1370
        %1395 = vmatprep.subr.bf16.mxu0 0
        %1396 = vmatpush1.bf16.msra.mxu0 %v1372
        %1397 = vmatprep.subr.bf16.mxu0 0
        %1398 = vmatpush1.bf16.msra.mxu0 0
        %1399 = vmatprep.subr.bf16.mxu0 0
        %1400 = vmatpush1.bf16.msra.mxu0 0
        %1401 = vmatprep.subr.bf16.mxu0 0
        %1402 = vmatpush1.bf16.msra.mxu0 0
        %1403 = vmatprep.subr.bf16.mxu0 0
        %1404 = vmatpush1.bf16.msra.mxu0 0
        %1405 = vmatprep.subr.bf16.mxu0 0
        %1406 = vmatpush1.bf16.msra.mxu0 0
        %1407 = vmatprep.subr.bf16.mxu0 0
        %1408 = vmatpush1.bf16.msra.mxu0 0
        %1409 = vmatprep.subr.bf16.mxu0 0
        %1410 = vmatpush1.bf16.msra.mxu0 0
        %1411 = vmatprep.subr.bf16.mxu0 0
        %1412 = vmatpush1.bf16.msra.mxu0 0
        %1413 = vmatprep.mubr.bf16.mxu0 0
        %1414 = vmatmul.mubr.bf16.gmra.mrb[0].mxu0 %v1356
        %v1415 = vpop.f32.mrb[0].mxu0
        %v1416 = vadd.f32 0.0, %v1415
        %v1417 = vpop.f32.mrb[0].mxu0
        %v1418 = vpop.f32.mrb[0].mxu0
        %v1419 = vpop.f32.mrb[0].mxu0
        %1420 = vdwg.mxu0
        %1422 = vrot.lane.b32.xlu0 %v1416, 16
        %v1423 = vpop.permute.xlu0 %1422
        %vm1425 = vcmask 195712
        %1426 = vst.msk [vmem:[#allocation2] sm:$0xff] %vm1425, %v1423
        %v1427 = vadd.f32 %v1261, %v1355
        %1428 = vrot.lane.b32.xlu0 %v569, 104
        %v1429 = vpop.permute.xlu0 %1428
        %1430 = vrot.lane.b32.xlu0 %v754, 104
        %v1431 = vpop.permute.xlu0 %1430
        %1432 = vrot.lane.b32.xlu0 %v755, 104
        %v1433 = vpop.permute.xlu0 %1432
        %1434 = vrot.lane.b32.xlu0 %v756, 104
        %v1435 = vpop.permute.xlu0 %1434
        %1436 = vrot.lane.b32.xlu0 %v757, 104
        %v1437 = vpop.permute.xlu0 %1436
        %1438 = vrot.lane.b32.xlu0 %v758, 104
        %v1439 = vpop.permute.xlu0 %1438
        %1440 = vrot.lane.b32.xlu0 %v759, 104
        %v1441 = vpop.permute.xlu0 %1440
        %1442 = vrot.lane.b32.xlu0 %v760, 104
        %v1443 = vpop.permute.xlu0 %1442
        %1444 = vrot.lane.b32.xlu0 %v761, 104
        %v1445 = vpop.permute.xlu0 %1444
        %v1447 = vsel %vm959, %v1429, 0
        %v1450 = vsel %vm959, %v1431, 0
        %v1453 = vsel %vm959, %v1433, 0
        %v1456 = vsel %vm959, %v1435, 0
        %v1459 = vsel %vm959, %v1437, 0
        %v1462 = vsel %vm959, %v1439, 0
        %v1465 = vsel %vm959, %v1441, 0
        %v1468 = vsel %vm959, %v1443, 0
        %v1471 = vsel %vm959, %v1445, 0
        %1473 = vmatprep.subr.bf16.mxu0 0
        %1474 = vmatpush1.bf16.xpose.msra.mxu0 %v1450
        %1475 = vmatprep.subr.bf16.mxu0 0
        %1476 = vmatpush1.bf16.xpose.msra.mxu0 %v1453
        %1477 = vmatprep.subr.bf16.mxu0 0
        %1478 = vmatpush1.bf16.xpose.msra.mxu0 %v1456
        %1479 = vmatprep.subr.bf16.mxu0 0
        %1480 = vmatpush1.bf16.xpose.msra.mxu0 %v1459
        %1481 = vmatprep.subr.bf16.mxu0 0
        %1482 = vmatpush1.bf16.xpose.msra.mxu0 %v1462
        %1483 = vmatprep.subr.bf16.mxu0 0
        %1484 = vmatpush1.bf16.xpose.msra.mxu0 %v1465
        %1485 = vmatprep.subr.bf16.mxu0 0
        %1486 = vmatpush1.bf16.xpose.msra.mxu0 %v1468
        %1487 = vmatprep.subr.bf16.mxu0 0
        %1488 = vmatpush1.bf16.xpose.msra.mxu0 %v1471
        %1489 = vmatprep.subr.bf16.mxu0 0
        %1490 = vmatpush1.bf16.xpose.msra.mxu0 0
        %1491 = vmatprep.subr.bf16.mxu0 0
        %1492 = vmatpush1.bf16.xpose.msra.mxu0 0
        %1493 = vmatprep.subr.bf16.mxu0 0
        %1494 = vmatpush1.bf16.xpose.msra.mxu0 0
        %1495 = vmatprep.subr.bf16.mxu0 0
        %1496 = vmatpush1.bf16.xpose.msra.mxu0 0
        %1497 = vmatprep.subr.bf16.mxu0 0
        %1498 = vmatpush1.bf16.xpose.msra.mxu0 0
        %1499 = vmatprep.subr.bf16.mxu0 0
        %1500 = vmatpush1.bf16.xpose.msra.mxu0 0
        %1501 = vmatprep.subr.bf16.mxu0 0
        %1502 = vmatpush1.bf16.xpose.msra.mxu0 0
        %1503 = vmatprep.subr.bf16.mxu0 0
        %1504 = vmatpush1.bf16.xpose.msra.mxu0 0
        %1505 = vmatprep.mubr.bf16.mxu0 0
        %1506 = vmatmul.mubr.bf16.gmra.mrb[0].mxu0 %v1447
        %v1507 = vpop.f32.mrb[0].mxu0
        %v1508 = vadd.f32 %v958, %v1507
        %v1509 = vpop.f32.mrb[0].mxu0
        %v1510 = vpop.f32.mrb[0].mxu0
        %v1511 = vpop.f32.mrb[0].mxu0
        %1512 = vdwg.mxu0
        %1513 = vmax.xlane.f32.xlu0 %v1508
        %v1514 = vpop.xlane.xlu0 %1513
        %v1515 = vsub.f32 %v1508, %v1514
        %v1516 = vmul.f32 %v1515, 1.442695
        %v1517 = vpow.pop %v1516
        %1518 = vadd.xlane.f32.xlu0 %v1517
        %v1519 = vpop.xlane.xlu0 %1518
        %v1520 = vrcp.pop %v1519
        %v1521 = vmul.f32 %v1517, %v1520
        %v1522 = vpack.c.bf16 %v1521, %v1521
        %1523 = vrot.lane.b32.xlu0 %v946, 104
        %v1524 = vpop.permute.xlu0 %1523
        %1525 = vrot.lane.b32.xlu0 %v947, 104
        %v1526 = vpop.permute.xlu0 %1525
        %1527 = vrot.lane.b32.xlu0 %v948, 104
        %v1528 = vpop.permute.xlu0 %1527
        %1529 = vrot.lane.b32.xlu0 %v949, 104
        %v1530 = vpop.permute.xlu0 %1529
        %1531 = vrot.lane.b32.xlu0 %v950, 104
        %v1532 = vpop.permute.xlu0 %1531
        %1533 = vrot.lane.b32.xlu0 %v951, 104
        %v1534 = vpop.permute.xlu0 %1533
        %1535 = vrot.lane.b32.xlu0 %v952, 104
        %v1536 = vpop.permute.xlu0 %1535
        %1537 = vrot.lane.b32.xlu0 %v953, 104
        %v1538 = vpop.permute.xlu0 %1537
        %1547 = vmatprep.subr.bf16.mxu0 0
        %1548 = vmatpush1.bf16.msra.mxu0 %v1524
        %1549 = vmatprep.subr.bf16.mxu0 0
        %1550 = vmatpush1.bf16.msra.mxu0 %v1526
        %1551 = vmatprep.subr.bf16.mxu0 0
        %1552 = vmatpush1.bf16.msra.mxu0 %v1528
        %1553 = vmatprep.subr.bf16.mxu0 0
        %1554 = vmatpush1.bf16.msra.mxu0 %v1530
        %1555 = vmatprep.subr.bf16.mxu0 0
        %1556 = vmatpush1.bf16.msra.mxu0 %v1532
        %1557 = vmatprep.subr.bf16.mxu0 0
        %1558 = vmatpush1.bf16.msra.mxu0 %v1534
        %1559 = vmatprep.subr.bf16.mxu0 0
        %1560 = vmatpush1.bf16.msra.mxu0 %v1536
        %1561 = vmatprep.subr.bf16.mxu0 0
        %1562 = vmatpush1.bf16.msra.mxu0 %v1538
        %1563 = vmatprep.subr.bf16.mxu0 0
        %1564 = vmatpush1.bf16.msra.mxu0 0
        %1565 = vmatprep.subr.bf16.mxu0 0
        %1566 = vmatpush1.bf16.msra.mxu0 0
        %1567 = vmatprep.subr.bf16.mxu0 0
        %1568 = vmatpush1.bf16.msra.mxu0 0
        %1569 = vmatprep.subr.bf16.mxu0 0
        %1570 = vmatpush1.bf16.msra.mxu0 0
        %1571 = vmatprep.subr.bf16.mxu0 0
        %1572 = vmatpush1.bf16.msra.mxu0 0
        %1573 = vmatprep.subr.bf16.mxu0 0
        %1574 = vmatpush1.bf16.msra.mxu0 0
        %1575 = vmatprep.subr.bf16.mxu0 0
        %1576 = vmatpush1.bf16.msra.mxu0 0
        %1577 = vmatprep.subr.bf16.mxu0 0
        %1578 = vmatpush1.bf16.msra.mxu0 0
        %1579 = vmatprep.mubr.bf16.mxu0 0
        %1580 = vmatmul.mubr.bf16.gmra.mrb[0].mxu0 %v1522
        %v1581 = vpop.f32.mrb[0].mxu0
        %v1582 = vadd.f32 0.0, %v1581
        %v1583 = vpop.f32.mrb[0].mxu0
        %v1584 = vpop.f32.mrb[0].mxu0
        %v1585 = vpop.f32.mrb[0].mxu0
        %1586 = vdwg.mxu0
        %1588 = vrot.lane.b32.xlu0 %v1582, 24
        %v1589 = vpop.permute.xlu0 %1588
        %vm1591 = vcmask 261312
        %1592 = vst.msk [vmem:[#allocation2] sm:$0xff] %vm1591, %v1589
        %v1593 = vadd.f32 %v1427, %v1521
        %v1594 = vld [vmem:[#allocation2] sm:$0xff]
        %v1595 = vpack.c.bf16 %v1594, %v1594
        %v1596 = vld [vmem:[%s7] sm:$0xf]
        %v1597 = vld [vmem:[%s7 + $0x4] sm:$0xf]
        %v1598 = vld [vmem:[%s7 + $0x8] sm:$0xf]
        %v1599 = vld [vmem:[%s7 + $0xc] sm:$0xf]
        %v1600 = vld [vmem:[%s11] sm:$0x1]
        %v1602 = vlaneseq
        %v1603 = vshrl.u32 %v1602, 7
        %v1604 = vsub.s32 0, %v1603
        %v1605 = vrot.slane %v1600, %v1604
        %v1611 = vunpack.c.l.b16 %v1596
        %v1612 = vunpack.c.l.b16 %v1597
        %v1613 = vunpack.c.l.b16 %v1598
        %v1614 = vunpack.c.l.b16 %v1599
        %v1615 = vpack.c.b16 %v1612, %v1611
        %v1616 = vpack.c.b16 %v1614, %v1613
        %v1620 = vsel %vm525, %v1595, 0
        %1622 = vmatprep.subr.bf16.mxu0 0
        %1623 = vmatpush1.bf16.msra.mxu0 %v1615
        %1624 = vmatprep.subr.bf16.mxu0 0
        %1625 = vmatpush1.bf16.msra.mxu0 %v1616
        %1626 = vmatprep.subr.bf16.mxu0 0
        %1627 = vmatpush1.bf16.msra.mxu0 0
        %1628 = vmatprep.subr.bf16.mxu0 0
        %1629 = vmatpush1.bf16.msra.mxu0 0
        %1630 = vmatprep.subr.bf16.mxu0 0
        %1631 = vmatpush1.bf16.msra.mxu0 0
        %1632 = vmatprep.subr.bf16.mxu0 0
        %1633 = vmatpush1.bf16.msra.mxu0 0
        %1634 = vmatprep.subr.bf16.mxu0 0
        %1635 = vmatpush1.bf16.msra.mxu0 0
        %1636 = vmatprep.subr.bf16.mxu0 0
        %1637 = vmatpush1.bf16.msra.mxu0 0
        %1638 = vmatprep.subr.bf16.mxu0 0
        %1639 = vmatpush1.bf16.msra.mxu0 0
        %1640 = vmatprep.subr.bf16.mxu0 0
        %1641 = vmatpush1.bf16.msra.mxu0 0
        %1642 = vmatprep.subr.bf16.mxu0 0
        %1643 = vmatpush1.bf16.msra.mxu0 0
        %1644 = vmatprep.subr.bf16.mxu0 0
        %1645 = vmatpush1.bf16.msra.mxu0 0
        %1646 = vmatprep.subr.bf16.mxu0 0
        %1647 = vmatpush1.bf16.msra.mxu0 0
        %1648 = vmatprep.subr.bf16.mxu0 0
        %1649 = vmatpush1.bf16.msra.mxu0 0
        %1650 = vmatprep.subr.bf16.mxu0 0
        %1651 = vmatpush1.bf16.msra.mxu0 0
        %1652 = vmatprep.subr.bf16.mxu0 0
        %1653 = vmatpush1.bf16.msra.mxu0 0
        %1654 = vmatprep.mubr.bf16.mxu0 0
        %1655 = vmatmul.mubr.bf16.gmra.mrb[0].mxu0 %v1620
        %v1656 = vpop.f32.mrb[0].mxu0
        %v1657 = vadd.f32 %v1605, %v1656
        %v1658 = vpop.f32.mrb[0].mxu0
        %v1659 = vpop.f32.mrb[0].mxu0
        %v1660 = vpop.f32.mrb[0].mxu0
        %1661 = vdwg.mxu0
        %1662 = vst.msk [vmem:[%s445] sm:$0xff] %vm525, %v1657
        %v1663 = vmul.f32 %v1593, 0.25
        %1664 = vst [vmem:[%s452] sm:$0xff] %v1663
        %s1665 = sand.u32 %s291, 1
        %s1666 = scalar_lea.sflag [#allocation6], %s1665
        %s1667 = sand.u32 %s291, 1
        %s1668 = smul.addr %s1667, 8
        %s1669 = scalar_lea.vmem [#allocation5], %s1668
        %s1670 = sand.u32 %s317, 1
        %s1671 = scalar_lea.sflag [#allocation8], %s1670
        %s1672 = sand.u32 %s317, 1
        %s1673 = smul.addr %s1672, 8
        %s1674 = scalar_lea.vmem [#allocation7], %s1673
        // Predicated region
        $region65: #{tpu_custom_call.1} parent=63 // pred_check
          %p1675 = pneg %p301
        $region66: #{tpu_custom_call.1} parent=63 // pred_check_branch
          %1677 = sbr.rel (%p1675) target = $region68
        $region67: #{tpu_custom_call.1} parent=63 // pred_region
          %s1679 = ssub.s32 128, 128
          %1680 = vsyncadd %s1666, %s1679
          %s1681 = smul.addr %s37, 128
          %s1682 = scalar_lea.hbm %s12, %s1681
          %s1684 = sshll.u32 %s1669, 4
          %s1685 = int_to_ptr.vmem [resolvable:$true] %s1684
          %1687 = dma.vmem_to_hbm [thread:$0]  %s1685, 128, %s1682, %s1666
        $region68: #{tpu_custom_call.1} parent=63 // pred_fallthru
          _
        // Predicated region
        $region69: #{tpu_custom_call.1} parent=63 // pred_check
          %p1688 = pneg %p327
        $region70: #{tpu_custom_call.1} parent=63 // pred_check_branch
          %1690 = sbr.rel (%p1688) target = $region72
        $region71: #{tpu_custom_call.1} parent=63 // pred_region
          %s1692 = ssub.s32 128, 128
          %1693 = vsyncadd %s1671, %s1692
          %s1694 = smul.addr %s37, 128
          %s1695 = scalar_lea.hbm %s13, %s1694
          %s1697 = sshll.u32 %s1674, 4
          %s1698 = int_to_ptr.vmem [resolvable:$true] %s1697
          %1700 = dma.vmem_to_hbm [thread:$0]  %s1698, 128, %s1695, %s1671
        $region72: #{tpu_custom_call.1} parent=63 // pred_fallthru
          _
      $region64: #{tpu_custom_call.1} parent=5 // pred_fallthru
        _
      %p1701 = scmp.le.s32.totalorder 2, %s32
      // Predicated region
      $region73: #{tpu_custom_call.1} parent=5 // pred_check
        %p1702 = pneg %p1701
      $region74: #{tpu_custom_call.1} parent=5 // pred_check_branch
        %1704 = sbr.rel (%p1702) target = $region76
      $region75: #{tpu_custom_call.1} parent=5 // pred_region
        %s1705 = ssub.s32 %s32, 2
        // Predicated region
        $region77: #{tpu_custom_call.1} parent=75 // pred_check
          %p1706 = pneg %p307
        $region78: #{tpu_custom_call.1} parent=75 // pred_check_branch
          %1708 = sbr.rel (%p1706) target = $region80
        $region79: #{tpu_custom_call.1} parent=75 // pred_region
          %s1709 = sand.u32 %s292, 1
          %s1710 = scalar_lea.sflag [#allocation6], %s1709
          %s1711 = sand.u32 %s292, 1
          %s1712 = smul.addr %s1711, 8
          %s1713 = scalar_lea.vmem [#allocation5], %s1712
          %1714 = dma.done %s1710, 128
        $region80: #{tpu_custom_call.1} parent=75 // pred_fallthru
          _
        // Predicated region
        $region81: #{tpu_custom_call.1} parent=75 // pred_check
          %p1715 = pneg %p333
        $region82: #{tpu_custom_call.1} parent=75 // pred_check_branch
          %1717 = sbr.rel (%p1715) target = $region84
        $region83: #{tpu_custom_call.1} parent=75 // pred_region
          %s1718 = sand.u32 %s318, 1
          %s1719 = scalar_lea.sflag [#allocation8], %s1718
          %s1720 = sand.u32 %s318, 1
          %s1721 = smul.addr %s1720, 8
          %s1722 = scalar_lea.vmem [#allocation7], %s1721
          %1723 = dma.done %s1719, 128
        $region84: #{tpu_custom_call.1} parent=75 // pred_fallthru
          _
      $region76: #{tpu_custom_call.1} parent=5 // pred_fallthru
        _
    $region6: #{tpu_custom_call.1} parent=1 // loop_footer
      %s36 = sadd.s32 1, %s32
    $region7: #{tpu_custom_call.1} parent=1 // loop_footer_branch
      %31 = sbr.rel target = $region3
    $region8: #{tpu_custom_call.1} parent=1 // loop_exit
      _
    %1724 = vsyncpa [#allocation6], 1
    %s1725 = scalar_lea.sflag [#allocation6], 1
    %1726 = vsyncpa %s1725, 1
    %1727 = vsyncpa [#allocation8], 1
    %s1728 = scalar_lea.sflag [#allocation8], 1
    %1729 = vsyncpa %s1728, 1

</llo_original>
